<compile_context>
chip_gen: v5e
topology: v5e:2x2
jax: 0.10.0
libtpu: 0.0.40
codegen_flags: <defaults>
</compile_context>

<pallas_src>
import functools

import numpy as np
import jax
import jax.numpy as jnp
from jax.experimental import pallas as pl
from jax.experimental.pallas import tpu as pltpu


_LANES = 128
_RESIDENT_RHS_BYTES = 8 << 20     # VMEM budget for keeping the bf16 rhs splits resident


# -----------------------------------------------------------------------------
# ARAPLoss.__init__ equivalent: dense 0/1 adjacency ("laplacian") from faces.
# -----------------------------------------------------------------------------
def build_laplacian(nv, faces):
    faces = np.asarray(faces, dtype=np.int64)
    lap = np.zeros((nv, nv), dtype=np.float32)
    lap[faces[:, 0], faces[:, 1]] = 1
    lap[faces[:, 1], faces[:, 0]] = 1
    lap[faces[:, 1], faces[:, 2]] = 1
    lap[faces[:, 2], faces[:, 1]] = 1
    lap[faces[:, 2], faces[:, 0]] = 1
    lap[faces[:, 0], faces[:, 2]] = 1
    return lap


def _round_up(n, m):
    return ((n + m - 1) // m) * m


def _pick_tiles(n):
    """(row tile tm, contraction tile tk); powers of two, >=2 row tiles when the mesh allows."""
    if n > 2048:
        return 256, 512
    if n > 1024:
        return 128, 512
    if n > 512:
        return 128, 256
    return 128, 128


def prepare_laplacian(laplacian, tm, tk):
    """Zero-pad to a tile multiple and cast to bf16 on the host (0/1 is exact in bf16)."""
    lap = np.asarray(laplacian, dtype=np.float32)
    n = lap.shape[0]
    step = max(tm, tk)                       # tm, tk are powers of two -> lcm == max
    n_pad = max(step, _round_up(n, step))
    padded = np.zeros((n_pad, n_pad), np.float32)
    padded[:n, :n] = lap
    try:                                     # cast on host: avoids shipping an f32 O(N^2) buffer
        import ml_dtypes
        padded = padded.astype(ml_dtypes.bfloat16)
    except ImportError:
        pass
    return jnp.asarray(padded, dtype=jnp.bfloat16)


def _split_bf16(x):
    """x (f32) == r0 + r1 + r2 with every term exactly representable in bf16 (error ~2^-24)."""
    r0 = x.astype(jnp.bfloat16)
    d1 = x - r0.astype(jnp.float32)
    r1 = d1.astype(jnp.bfloat16)
    d2 = d1 - r1.astype(jnp.float32)
    r2 = d2.astype(jnp.bfloat16)
    return r0, r1, r2


# -----------------------------------------------------------------------------
# Pallas kernel: fused  L @ [x | dx | 1]  +  per-vertex ARAP residual.
# -----------------------------------------------------------------------------
def _arap_kernel(l_ref, r0_ref, r1_ref, r2_ref, rows_ref, wsign_ref, out_ref,
                 *, tk, deg_col, nnz_lane, resident_rhs):
    k = pl.program_id(1)

    @pl.when(k == 0)
    def _init():
        out_ref[...] = jnp.zeros_like(out_ref)

    l = l_ref[...]                                        # (tm, tk) bf16 adjacency tile
    if resident_rhs:
        start = pl.multiple_of(k * tk, tk)                # slice the VMEM-resident splits
        r0 = r0_ref[pl.ds(start, tk), :]
        r1 = r1_ref[pl.ds(start, tk), :]
        r2 = r2_ref[pl.ds(start, tk), :]
    else:
        r0, r1, r2 = r0_ref[...], r1_ref[...], r2_ref[...]

    # Three native single-pass bf16 MXU matmuls, f32 accumulation.  Exact to f32
    # level because L is exact in bf16 and r0+r1+r2 reconstructs the f32 rhs.
    out_ref[...] += (jnp.dot(l, r0, preferred_element_type=jnp.float32) +
                     jnp.dot(l, r1, preferred_element_type=jnp.float32) +
                     jnp.dot(l, r2, preferred_element_type=jnp.float32))

    @pl.when(k == pl.num_programs(1) - 1)
    def _finalize():
        acc = out_ref[...]                                # full (L @ rhs) for this row tile
        deg = acc[:, deg_col:deg_col + 1]                 # (tm, 1) vertex degree (ones column)
        sub = acc - rows_ref[...]                         # (Lx)_j - x_j on the coord columns
        s2 = sub * sub
        # signed[:, b] = fx_j - fdx_j for batch b.  Tiny (once per row tile); HIGHEST
        # keeps s2 un-quantized (DEFAULT would round it to bf16 and break tolerance).
        signed = jnp.dot(s2, wsign_ref[...],
                         precision=jax.lax.Precision.HIGHEST,
                         preferred_element_type=jnp.float32)
        lane = jax.lax.broadcasted_iota(jnp.int32, signed.shape, 1)
        # lanes 0..B-1: deg_j*|fx_j - fdx_j| ; lane B: deg_j (partial nnz) ; rest: 0.
        out_ref[...] = jnp.abs(signed) * deg + jnp.where(lane == nnz_lane, deg, 0.0)


def arap_loss(dx, x, lap_padded, *, tm, tk, average=False):
    """Pallas TPU equivalent of ARAPLoss.forward(dx, x), applied per batch element.

    `lap_padded` is the (n_pad, n_pad) bf16 adjacency from prepare_laplacian().
    """
    del average  # stored by the torch module but never used in its forward
    x = jnp.asarray(x, jnp.float32)
    dx = jnp.asarray(dx, jnp.float32)
    B, N, _ = x.shape
    assert dx.shape == x.shape and x.shape[-1] == 3
    assert B * 8 + 8 <= _LANES, "pack-into-one-vreg layout assumes a small batch"
    n_pad = lap_padded.shape[0]
    assert lap_padded.shape == (n_pad, n_pad) and lap_padded.dtype == jnp.bfloat16
    assert n_pad % tm == 0 and n_pad % tk == 0 and n_pad >= N

    C = _LANES
    deg_col = 8 * B                       # ones-column -> vertex degrees from the same matmul
    nnz_lane = B                          # output lane accumulating nnz(L)

    # Packed lane-dense rhs: cols [8b:8b+3]=x[b], [8b+3:8b+6]=dx[b], col deg_col = 1.
    rhs = jnp.zeros((n_pad, C), jnp.float32)
    for b in range(B):
        rhs = rhs.at[:N, 8 * b:8 * b + 3].set(x[b])
        rhs = rhs.at[:N, 8 * b + 3:8 * b + 6].set(dx[b])
    rhs = rhs.at[:N, deg_col].set(1.0)
    r0, r1, r2 = _split_bf16(rhs)         # exact 3-way bf16 decomposition of the rhs

    # +/-1 sign matrix folding the per-batch (+x^2, -dx^2) group sums into one small dot.
    wsign_np = np.zeros((C, _LANES), np.float32)
    for b in range(B):
        wsign_np[8 * b:8 * b + 3, b] = 1.0
        wsign_np[8 * b + 3:8 * b + 6, b] = -1.0
    wsign = jnp.asarray(wsign_np)

    rt, kt = n_pad // tm, n_pad // tk
    resident = 3 * n_pad * C * 2 <= _RESIDENT_RHS_BYTES
    if resident:
        # Full-extent block, index invariant -> DMA'd to VMEM once, sliced in-kernel.
        split_spec = pl.BlockSpec((n_pad, C), lambda i, k: (0, 0))
    else:
        # TODO(synk): very large meshes re-stream the rhs splits once per row tile; this
        # keeps the v7x 64 MiB VMEM budget safe at the cost of extra (small) rhs traffic.
        split_spec = pl.BlockSpec((tk, C), lambda i, k: (k, 0))

    kernel = functools.partial(_arap_kernel, tk=tk, deg_col=deg_col,
                               nnz_lane=nnz_lane, resident_rhs=resident)
    cost = pl.CostEstimate(
        flops=2 * 3 * n_pad * n_pad * C + 2 * n_pad * C * _LANES,
        transcendentals=0,
        bytes_accessed=(n_pad * n_pad * 2 + 3 * n_pad * C * 2 + n_pad * C * 4
                        + C * _LANES * 4 + n_pad * _LANES * 4))

    out = pl.pallas_call(
        kernel,
        grid=(rt, kt),
        in_specs=[
            pl.BlockSpec((tm, tk), lambda i, k: (i, k)),      # L tile (bf16, rows i / cols k)
            split_spec, split_spec, split_spec,               # bf16 rhs splits
            pl.BlockSpec((tm, C), lambda i, k: (i, 0)),       # f32 rhs rows at output rows
            pl.BlockSpec((C, _LANES), lambda i, k: (0, 0)),   # constant sign matrix
        ],
        out_specs=pl.BlockSpec((tm, _LANES), lambda i, k: (i, 0)),
        out_shape=jax.ShapeDtypeStruct((n_pad, _LANES), jnp.float32),
        compiler_params=pltpu.CompilerParams(
            dimension_semantics=("parallel", "arbitrary")),
        cost_estimate=cost,
    )(lap_padded, r0, r1, r2, rhs, wsign)

    totals = jnp.sum(out, axis=0)        # (128,) ; padded rows contribute exactly 0
    num = totals[:B]                     # sum_j deg_j * |fx_j - fdx_j|, per batch element
    nnz = totals[nnz_lane]               # number of nonzero laplacian entries
    return num / nnz


class ARAPLossPallas:
    """API-parity wrapper mirroring the torch ARAPLoss module."""

    def __init__(self, vertex, faces, average=False):
        self.nv = vertex.shape[0]
        self.nf = faces.shape[0]
        self.average = average           # kept for parity; unused by forward (as in torch)
        self.laplacian = build_laplacian(self.nv, faces)          # f32, for reference checks
        self.tm, self.tk = _pick_tiles(self.nv)
        self.lap_padded = prepare_laplacian(self.laplacian, self.tm, self.tk)  # bf16, once

    def __call__(self, dx, x):
        return arap_loss(dx, x, self.lap_padded, tm=self.tm, tk=self.tk,
                         average=self.average)


# -----------------------------------------------------------------------------
# Literal JAX port of the torch forward (its broadcasting composes for batch==1).
# -----------------------------------------------------------------------------
def reference_forward(dx, x, laplacian):
    lap = jnp.asarray(laplacian, jnp.float32)
    hi = jax.lax.Precision.HIGHEST
    diffx = jnp.zeros((x.shape[0], x.shape[1], x.shape[1]), jnp.float32)
    diffdx = jnp.zeros((x.shape[0], x.shape[1], x.shape[1]), jnp.float32)
    dx_sub = jnp.matmul(lap, dx, precision=hi)
    x_sub = jnp.matmul(lap, x, precision=hi)
    dx_diff = dx_sub - dx[:, None]
    x_diff = x_sub - x[:, None]
    diffdx = diffdx + jnp.sum(dx_diff ** 2, axis=-1)
    diffx = diffx + jnp.sum(x_diff ** 2, axis=-1)
    diff = jnp.abs(diffx - diffdx)
    ii, jj = np.nonzero(np.asarray(laplacian) != 0)      # lap.bool() selection
    return jnp.mean(diff[:, ii, jj], axis=1)


if __name__ == "__main__":
    # Deterministic mesh: 24x24 vertex grid (N=576 vertices, 1058 triangles).
    # Tiles come out as (tm, tk) = (128, 256), n_pad = 768 -> a 6x3 grid that
    # exercises the parallel row axis and the k-accumulation / finalize path.
    g = 23
    nvert = (g + 1) * (g + 1)

    def vid(r, c):
        return r * (g + 1) + c

    faces = []
    for r in range(g):
        for c in range(g):
            faces.append([vid(r, c), vid(r + 1, c), vid(r, c + 1)])
            faces.append([vid(r, c + 1), vid(r + 1, c), vid(r + 1, c + 1)])
    faces = np.asarray(faces, dtype=np.int32)

    rr, cc = np.meshgrid(np.arange(g + 1), np.arange(g + 1), indexing="ij")
    base = np.stack([cc.reshape(-1), rr.reshape(-1), np.zeros(nvert)], axis=-1)
    base = (0.2 * base).astype(np.float32)               # rest vertices (nvert, 3)

    B = 2
    key = jax.random.PRNGKey(0)
    kx, kd = jax.random.split(key)
    x = jnp.asarray(base)[None] + 0.05 * jax.random.normal(kx, (B, nvert, 3), jnp.float32)
    dx = 0.1 * jax.random.normal(kd, (B, nvert, 3), jnp.float32)

    loss_mod = ARAPLossPallas(base, faces)
    loss = loss_mod(dx, x)
    jax.block_until_ready(loss)

    # TODO(synk): the torch forward's broadcast only composes for batch==1 (or B==N);
    # batched inputs are therefore evaluated with per-sample semantics and verified
    # against the literal forward applied to each sample.
    ref = jnp.concatenate([
        reference_forward(dx[b:b + 1], x[b:b + 1], loss_mod.laplacian) for b in range(B)
    ])
    np.testing.assert_allclose(np.asarray(loss), np.asarray(ref), rtol=1e-4, atol=1e-4)

    print("KERNEL_OK")
</pallas_src>

<mosaic_0001>
module attributes {stable_mosaic.version = 11 : i64} {
  func.func @_arap_kernel(%arg0: i32, %arg1: i32, %arg2: memref<128x256xbf16, #tpu.memory_space<vmem>>, %arg3: memref<768x128xbf16, #tpu.memory_space<vmem>>, %arg4: memref<768x128xbf16, #tpu.memory_space<vmem>>, %arg5: memref<768x128xbf16, #tpu.memory_space<vmem>>, %arg6: memref<128x128xf32, #tpu.memory_space<vmem>>, %arg7: memref<128x128xf32, #tpu.memory_space<vmem>>, %arg8: memref<128x128xf32, #tpu.memory_space<vmem>>) attributes {dimension_semantics = [#tpu.dimension_semantics<parallel>, #tpu.dimension_semantics<arbitrary>], iteration_bounds = array<i64: 6, 3>, scalar_prefetch = 0 : i64, scratch_operands = 0 : i64, tpu.core_type = #tpu.core_type<tc>, window_params = [{transform_indices = @transform_0, window_bounds = array<i64: 128, 256>}, {pipeline_mode = #tpu.pipeline_mode<synchronous>, transform_indices = @transform_1, window_bounds = array<i64: 768, 128>}, {pipeline_mode = #tpu.pipeline_mode<synchronous>, transform_indices = @transform_2, window_bounds = array<i64: 768, 128>}, {pipeline_mode = #tpu.pipeline_mode<synchronous>, transform_indices = @transform_3, window_bounds = array<i64: 768, 128>}, {transform_indices = @transform_4, window_bounds = array<i64: 128, 128>}, {pipeline_mode = #tpu.pipeline_mode<synchronous>, transform_indices = @transform_5, window_bounds = array<i64: 128, 128>}, {transform_indices = @transform_6, window_bounds = array<i64: 128, 128>}]} {
    %c0_i32 = arith.constant 0 : i32
    %0 = arith.cmpi eq, %arg1, %c0_i32 : i32
    %1 = arith.extui %0 : i1 to i32
    %c0_i32_0 = arith.constant 0 : i32
    %2 = arith.cmpi ne, %1, %c0_i32_0 : i32
    scf.if %2 {
      %cst_12 = arith.constant 0.000000e+00 : f32
      %23 = vector.broadcast %cst_12 : f32 to vector<128x128xf32>
      %c0_13 = arith.constant 0 : index
      %c0_14 = arith.constant 0 : index
      %24 = vector.load %arg8[%c0_13, %c0_14] : memref<128x128xf32, #tpu.memory_space<vmem>>, vector<128x128xf32>
      tpu.vector_store %arg8[%c0_13, %c0_14], %23 {strides = array<i32>} : memref<128x128xf32, #tpu.memory_space<vmem>>, vector<128x128xf32>,
    } else {
    }
    %c0 = arith.constant 0 : index
    %c0_1 = arith.constant 0 : index
    %3 = vector.load %arg2[%c0, %c0_1] : memref<128x256xbf16, #tpu.memory_space<vmem>>, vector<128x256xbf16>
    %c256_i32 = arith.constant 256 : i32
    %4 = arith.muli %arg1, %c256_i32 : i32
    %5 = tpu.assume_multiple %4, 256 : i32
    %6 = arith.index_cast %5 : i32 to index
    %c0_2 = arith.constant 0 : index
    %7 = vector.load %arg3[%6, %c0_2] : memref<768x128xbf16, #tpu.memory_space<vmem>>, vector<256x128xbf16>
    %8 = arith.index_cast %5 : i32 to index
    %c0_3 = arith.constant 0 : index
    %9 = vector.load %arg4[%8, %c0_3] : memref<768x128xbf16, #tpu.memory_space<vmem>>, vector<256x128xbf16>
    %10 = arith.index_cast %5 : i32 to index
    %c0_4 = arith.constant 0 : index
    %11 = vector.load %arg5[%10, %c0_4] : memref<768x128xbf16, #tpu.memory_space<vmem>>, vector<256x128xbf16>
    %c0_5 = arith.constant 0 : index
    %c0_6 = arith.constant 0 : index
    %12 = vector.load %arg8[%c0_5, %c0_6] : memref<128x128xf32, #tpu.memory_space<vmem>>, vector<128x128xf32>
    %cst = arith.constant dense<0.000000e+00> : vector<128x128xf32>
    %13 = tpu.matmul %3, %7, %cst {dimension_numbers = #tpu.dot_dimension_numbers<[1], [0], [0], [1], [0, 0, 1, 1], [], []>} : vector<128x256xbf16>, vector<256x128xbf16>, vector<128x128xf32> -> vector<128x128xf32>
    %cst_7 = arith.constant dense<0.000000e+00> : vector<128x128xf32>
    %14 = tpu.matmul %3, %9, %cst_7 {dimension_numbers = #tpu.dot_dimension_numbers<[1], [0], [0], [1], [0, 0, 1, 1], [], []>} : vector<128x256xbf16>, vector<256x128xbf16>, vector<128x128xf32> -> vector<128x128xf32>
    %15 = arith.addf %13, %14 : vector<128x128xf32>
    %cst_8 = arith.constant dense<0.000000e+00> : vector<128x128xf32>
    %16 = tpu.matmul %3, %11, %cst_8 {dimension_numbers = #tpu.dot_dimension_numbers<[1], [0], [0], [1], [0, 0, 1, 1], [], []>} : vector<128x256xbf16>, vector<256x128xbf16>, vector<128x128xf32> -> vector<128x128xf32>
    %17 = arith.addf %15, %16 : vector<128x128xf32>
    %18 = arith.addf %12, %17 : vector<128x128xf32>
    %c0_9 = arith.constant 0 : index
    %c0_10 = arith.constant 0 : index
    %19 = vector.load %arg8[%c0_9, %c0_10] : memref<128x128xf32, #tpu.memory_space<vmem>>, vector<128x128xf32>
    tpu.vector_store %arg8[%c0_9, %c0_10], %18 {strides = array<i32>} : memref<128x128xf32, #tpu.memory_space<vmem>>, vector<128x128xf32>,
    %c2_i32 = arith.constant 2 : i32
    %20 = arith.cmpi eq, %arg1, %c2_i32 : i32
    %21 = arith.extui %20 : i1 to i32
    %c0_i32_11 = arith.constant 0 : i32
    %22 = arith.cmpi ne, %21, %c0_i32_11 : i32
    scf.if %22 {
      %c0_12 = arith.constant 0 : index
      %c0_13 = arith.constant 0 : index
      %23 = vector.load %arg8[%c0_12, %c0_13] : memref<128x128xf32, #tpu.memory_space<vmem>>, vector<128x128xf32>
      %24 = vector.extract_strided_slice %23 {offsets = [0, 16], sizes = [128, 1], strides = [1, 1]} : vector<128x128xf32> to vector<128x1xf32>
      %c0_14 = arith.constant 0 : index
      %c0_15 = arith.constant 0 : index
      %25 = vector.load %arg6[%c0_14, %c0_15] : memref<128x128xf32, #tpu.memory_space<vmem>>, vector<128x128xf32>
      %26 = arith.subf %23, %25 : vector<128x128xf32>
      %27 = arith.mulf %26, %26 : vector<128x128xf32>
      %c0_16 = arith.constant 0 : index
      %c0_17 = arith.constant 0 : index
      %28 = vector.load %arg7[%c0_16, %c0_17] : memref<128x128xf32, #tpu.memory_space<vmem>>, vector<128x128xf32>
      %cst_18 = arith.constant dense<0.000000e+00> : vector<128x128xf32>
      %29 = tpu.matmul %27, %28, %cst_18 {dimension_numbers = #tpu.dot_dimension_numbers<[1], [0], [0], [1], [0, 0, 1, 1], [], []>, precision = #tpu.contract_precision<fp32>} : vector<128x128xf32>, vector<128x128xf32>, vector<128x128xf32> -> vector<128x128xf32>
      %30 = tpu.iota {dimensions = array<i32: 1>} : vector<128x128xi32>
      %31 = math.absf %29 : vector<128x128xf32>
      %32 = vector.broadcast %24 : vector<128x1xf32> to vector<128x128xf32>
      %33 = arith.mulf %31, %32 : vector<128x128xf32>
      %c2_i32_19 = arith.constant 2 : i32
      %34 = vector.broadcast %c2_i32_19 : i32 to vector<128x128xi32>
      %35 = arith.cmpi eq, %30, %34 : vector<128x128xi32>
      %cst_20 = arith.constant 0.000000e+00 : f32
      %36 = vector.shape_cast %24 : vector<128x1xf32> to vector<128x1xf32>
      %37 = vector.broadcast %36 : vector<128x1xf32> to vector<128x128xf32>
      %38 = vector.broadcast %cst_20 : f32 to vector<128x128xf32>
      %39 = arith.select %35, %37, %38 : vector<128x128xi1>, vector<128x128xf32>
      %40 = arith.addf %33, %39 : vector<128x128xf32>
      %c0_21 = arith.constant 0 : index
      %c0_22 = arith.constant 0 : index
      %41 = vector.load %arg8[%c0_21, %c0_22] : memref<128x128xf32, #tpu.memory_space<vmem>>, vector<128x128xf32>
      tpu.vector_store %arg8[%c0_21, %c0_22], %40 {strides = array<i32>} : memref<128x128xf32, #tpu.memory_space<vmem>>, vector<128x128xf32>,
    } else {
    }
    return
  }
  func.func @transform_0(%arg0: i32, %arg1: i32) -> (i32, i32) {
    %c0_i32 = arith.constant 0 : i32
    return %arg0, %arg1 : i32, i32
  }
  func.func @transform_1(%arg0: i32, %arg1: i32) -> (i32, i32) {
    %c0_i32 = arith.constant 0 : i32
    %c0_i32_0 = arith.constant 0 : i32
    %c0_i32_1 = arith.constant 0 : i32
    return %c0_i32, %c0_i32_0 : i32, i32
  }
  func.func @transform_2(%arg0: i32, %arg1: i32) -> (i32, i32) {
    %c0_i32 = arith.constant 0 : i32
    %c0_i32_0 = arith.constant 0 : i32
    %c0_i32_1 = arith.constant 0 : i32
    return %c0_i32, %c0_i32_0 : i32, i32
  }
  func.func @transform_3(%arg0: i32, %arg1: i32) -> (i32, i32) {
    %c0_i32 = arith.constant 0 : i32
    %c0_i32_0 = arith.constant 0 : i32
    %c0_i32_1 = arith.constant 0 : i32
    return %c0_i32, %c0_i32_0 : i32, i32
  }
  func.func @transform_4(%arg0: i32, %arg1: i32) -> (i32, i32) {
    %c0_i32 = arith.constant 0 : i32
    %c0_i32_0 = arith.constant 0 : i32
    return %arg0, %c0_i32 : i32, i32
  }
  func.func @transform_5(%arg0: i32, %arg1: i32) -> (i32, i32) {
    %c0_i32 = arith.constant 0 : i32
    %c0_i32_0 = arith.constant 0 : i32
    %c0_i32_1 = arith.constant 0 : i32
    return %c0_i32, %c0_i32_0 : i32, i32
  }
  func.func @transform_6(%arg0: i32, %arg1: i32) -> (i32, i32) {
    %c0_i32 = arith.constant 0 : i32
    %c0_i32_0 = arith.constant 0 : i32
    return %arg0, %c0_i32 : i32, i32
  }
}

</mosaic_0001>

<llo_original>
// kernel: tpu_custom_call.1
$region0: #{tpu_custom_call.1}
  #allocation0 [shape = 'u32[]', space=smem, size = 0x4, offset = 0x4, fixed_abs, tag = 'smem constant byte address 0x4 - core index']
  #allocation1 [shape = 'u32[72,128]{1,0:T(1,128)}', space=vmem, size = 0x9000, scoped, tag = 'internal scratch']
  %s0 = inlined_call_operand.hbm [shape: bf16[768,768], index: 0, kind: input, shape index: {}]
  %s1 = inlined_call_operand.hbm [shape: bf16[768,128], index: 1, kind: input, shape index: {}]
  %s2 = inlined_call_operand.hbm [shape: bf16[768,128], index: 2, kind: input, shape index: {}]
  %s3 = inlined_call_operand.hbm [shape: bf16[768,128], index: 3, kind: input, shape index: {}]
  %s4 = inlined_call_operand.hbm [shape: f32[768,128], index: 4, kind: input, shape index: {}]
  %s5 = inlined_call_operand.hbm [shape: f32[128,128], index: 5, kind: input, shape index: {}]
  %s6 = inlined_call_operand.hbm [shape: f32[768,128], index: 6, kind: output, shape index: {}]
  %s7 = sld [smem:[#allocation0]]
  $region89: #{tpu_custom_call.1} parent=0
    _
  %s9 = ssub.s32 1, %s7
  %s10 = scalar_select 0, %s9, %s7
  $region1: #{tpu_custom_call.1} parent=0
    #allocation2 [shape = 'u8[131072]{0}', space=vmem, size = 0x20000, scoped, tag = 'input window, operand 0']
    #allocation3 [shape = 's32[2]{0}', space=sflag, size = 0x8, scoped, tag = 'scoped memory for tpu_custom_call.1']
    #allocation4 [shape = 's32[2]{0}', space=sflag, size = 0x8, scoped, tag = 'scoped memory for tpu_custom_call.1']
    #allocation5 [shape = 'u8[196608]{0}', space=vmem, size = 0x30000, scoped, tag = 'input window, operand 1, single buffered']
    #allocation6 [shape = 's32[1]{0}', space=sflag, size = 0x4, scoped, tag = 'scoped memory for tpu_custom_call.1']
    #allocation7 [shape = 'u8[196608]{0}', space=vmem, size = 0x30000, scoped, tag = 'input window, operand 2, single buffered']
    #allocation8 [shape = 'u8[196608]{0}', space=vmem, size = 0x30000, scoped, tag = 'input window, operand 3, single buffered']
    #allocation9 [shape = 's32[1]{0}', space=sflag, size = 0x4, scoped, tag = 'scoped memory for tpu_custom_call.1']
    #allocation10 [shape = 'u8[131072]{0}', space=vmem, size = 0x20000, scoped, tag = 'input window, operand 4']
    #allocation11 [shape = 'u8[65536]{0}', space=vmem, size = 0x10000, scoped, tag = 'input window, operand 5, single buffered']
    #allocation12 [shape = 'u8[131072]{0}', space=vmem, size = 0x20000, scoped, tag = 'output window, operand 0']
    %11 = vsyncpa [#allocation3], 0
    %s12 = scalar_lea.sflag [#allocation3], 1
    %13 = vsyncpa %s12, 0
    %14 = vsyncpa [#allocation6], 0
    %15 = vsyncpa [#allocation9], 0
    %16 = vsyncpa [#allocation4], 0
    %s17 = scalar_lea.sflag [#allocation4], 1
    %18 = vsyncpa %s17, 0
    loop: start=0, step=1, limit=20
    $region2: #{tpu_custom_call.1} parent=1 // loop_pre_header
      _
    $region3: #{tpu_custom_call.1} parent=1 // loop_header
      %s20 = sphi 0, %s24
      %p21 = scmp.ge.s32.totalorder %s20, 20
      %s27 = sphi 0, %s39
      %s28 = sphi 0, %s35
      %s29 = sphi 0, %s27
      %s30 = sphi 0, %s28
      %s31 = sphi 0, %s29
      %s32 = sphi 0, %s30
      %s44 = sphi 0, %s46
      %s47 = sphi 0, %s44
      %s48 = sphi 0, %s47
      %s64 = sphi 0, %s48
      %s68 = sphi 0, %s68
      %s70 = sphi 0, %s68
      %s71 = sphi 0, %s70
      %s85 = sphi 0, %s71
      %s89 = sphi 0, %s89
      %s91 = sphi 0, %s89
      %s92 = sphi 0, %s91
      %s106 = sphi 0, %s92
      %s110 = sphi 0, %s110
      %s112 = sphi 0, %s110
      %s113 = sphi 0, %s112
      %s127 = sphi 0, %s113
      %s133 = sphi 0, %s135
      %s136 = sphi 0, %s133
      %s137 = sphi 0, %s136
      %s153 = sphi 0, %s137
      %s157 = sphi 0, %s157
      %s159 = sphi 0, %s157
      %s160 = sphi 0, %s159
      %s174 = sphi 0, %s160
      %s180 = sphi 0, %s182
      %s183 = sphi 0, %s180
      %s184 = sphi 0, %s183
      %s200 = sphi 0, %s184
    $region4: #{tpu_custom_call.1} parent=1 // loop_header_branch
      %23 = sbr.rel (%p21) target = $region8
    $region5: #{tpu_custom_call.1} parent=1 // loop_body
      %s25 = ssub.s32 %s20, 1
      %s26 = ssub.s32 %s20, 2
      %s33 = sadd.s32 1, %s28
      %p34 = scmp.ge.s32.totalorder %s33, 3
      %s35 = scalar_select %p34, 0, %s33
      %s36 = sadd.s32 1, %s27
      %s37 = scalar_select %p34, %s36, %s27
      %p38 = scmp.ge.s32.totalorder %s37, 6
      %s39 = scalar_select %p38, 0, %s37
      %s40 = ssub.s32 %s27, %s39
      %s41 = ssub.s32 %s28, %s35
      %s42 = sor.u32 %s40, %s41
      %p43 = scmp.eq.s32.totalorder %s42, 0
      %s45 = sadd.s32 %s44, 1
      %s46 = scalar_select %p43, %s44, %s45
      %p49 = pneg %p43
      %p50 = scmp.eq.s32.totalorder %s20, 17
      %p51 = por %p49, %p50
      %p52 = scmp.ne.s32.totalorder %s44, %s47
      %p53 = scmp.eq.s32.totalorder %s20, 0
      %p54 = por %p52, %p53
      %p55 = scmp.ne.s32.totalorder %s44, %s47
      %p56 = scmp.eq.s32.totalorder %s25, 17
      %p57 = por %p55, %p56
      %p58 = scmp.ne.s32.totalorder %s47, %s48
      %p59 = scmp.eq.s32.totalorder %s25, 0
      %p60 = por %p58, %p59
      %p61 = scmp.ne.s32.totalorder %s47, %s48
      %p62 = scmp.eq.s32.totalorder %s26, 17
      %p63 = por %p61, %p62
      %p65 = scmp.ne.s32.totalorder %s48, %s64
      %p66 = scmp.eq.s32.totalorder %s26, 0
      %p67 = por %p65, %p66
      %s69 = sadd.s32 %s68, 1
      %p72 = scmp.eq.s32.totalorder %s20, 17
      %p73 = scmp.ne.s32.totalorder %s68, %s70
      %p74 = scmp.eq.s32.totalorder %s20, 0
      %p75 = por %p73, %p74
      %p76 = scmp.ne.s32.totalorder %s68, %s70
      %p77 = scmp.eq.s32.totalorder %s25, 17
      %p78 = por %p76, %p77
      %p79 = scmp.ne.s32.totalorder %s70, %s71
      %p80 = scmp.eq.s32.totalorder %s25, 0
      %p81 = por %p79, %p80
      %p82 = scmp.ne.s32.totalorder %s70, %s71
      %p83 = scmp.eq.s32.totalorder %s26, 17
      %p84 = por %p82, %p83
      %p86 = scmp.ne.s32.totalorder %s71, %s85
      %p87 = scmp.eq.s32.totalorder %s26, 0
      %p88 = por %p86, %p87
      %s90 = sadd.s32 %s89, 1
      %p93 = scmp.eq.s32.totalorder %s20, 17
      %p94 = scmp.ne.s32.totalorder %s89, %s91
      %p95 = scmp.eq.s32.totalorder %s20, 0
      %p96 = por %p94, %p95
      %p97 = scmp.ne.s32.totalorder %s89, %s91
      %p98 = scmp.eq.s32.totalorder %s25, 17
      %p99 = por %p97, %p98
      %p100 = scmp.ne.s32.totalorder %s91, %s92
      %p101 = scmp.eq.s32.totalorder %s25, 0
      %p102 = por %p100, %p101
      %p103 = scmp.ne.s32.totalorder %s91, %s92
      %p104 = scmp.eq.s32.totalorder %s26, 17
      %p105 = por %p103, %p104
      %p107 = scmp.ne.s32.totalorder %s92, %s106
      %p108 = scmp.eq.s32.totalorder %s26, 0
      %p109 = por %p107, %p108
      %s111 = sadd.s32 %s110, 1
      %p114 = scmp.eq.s32.totalorder %s20, 17
      %p115 = scmp.ne.s32.totalorder %s110, %s112
      %p116 = scmp.eq.s32.totalorder %s20, 0
      %p117 = por %p115, %p116
      %p118 = scmp.ne.s32.totalorder %s110, %s112
      %p119 = scmp.eq.s32.totalorder %s25, 17
      %p120 = por %p118, %p119
      %p121 = scmp.ne.s32.totalorder %s112, %s113
      %p122 = scmp.eq.s32.totalorder %s25, 0
      %p123 = por %p121, %p122
      %p124 = scmp.ne.s32.totalorder %s112, %s113
      %p125 = scmp.eq.s32.totalorder %s26, 17
      %p126 = por %p124, %p125
      %p128 = scmp.ne.s32.totalorder %s113, %s127
      %p129 = scmp.eq.s32.totalorder %s26, 0
      %p130 = por %p128, %p129
      %s131 = ssub.s32 %s27, %s39
      %p132 = scmp.eq.s32.totalorder %s131, 0
      %s134 = sadd.s32 %s133, 1
      %s135 = scalar_select %p132, %s133, %s134
      %p138 = pneg %p132
      %p139 = scmp.eq.s32.totalorder %s20, 17
      %p140 = por %p138, %p139
      %p141 = scmp.ne.s32.totalorder %s133, %s136
      %p142 = scmp.eq.s32.totalorder %s20, 0
      %p143 = por %p141, %p142
      %p144 = scmp.ne.s32.totalorder %s133, %s136
      %p145 = scmp.eq.s32.totalorder %s25, 17
      %p146 = por %p144, %p145
      %p147 = scmp.ne.s32.totalorder %s136, %s137
      %p148 = scmp.eq.s32.totalorder %s25, 0
      %p149 = por %p147, %p148
      %p150 = scmp.ne.s32.totalorder %s136, %s137
      %p151 = scmp.eq.s32.totalorder %s26, 17
      %p152 = por %p150, %p151
      %p154 = scmp.ne.s32.totalorder %s137, %s153
      %p155 = scmp.eq.s32.totalorder %s26, 0
      %p156 = por %p154, %p155
      %s158 = sadd.s32 %s157, 1
      %p161 = scmp.eq.s32.totalorder %s20, 17
      %p162 = scmp.ne.s32.totalorder %s157, %s159
      %p163 = scmp.eq.s32.totalorder %s20, 0
      %p164 = por %p162, %p163
      %p165 = scmp.ne.s32.totalorder %s157, %s159
      %p166 = scmp.eq.s32.totalorder %s25, 17
      %p167 = por %p165, %p166
      %p168 = scmp.ne.s32.totalorder %s159, %s160
      %p169 = scmp.eq.s32.totalorder %s25, 0
      %p170 = por %p168, %p169
      %p171 = scmp.ne.s32.totalorder %s159, %s160
      %p172 = scmp.eq.s32.totalorder %s26, 17
      %p173 = por %p171, %p172
      %p175 = scmp.ne.s32.totalorder %s160, %s174
      %p176 = scmp.eq.s32.totalorder %s26, 0
      %p177 = por %p175, %p176
      %s178 = ssub.s32 %s27, %s39
      %p179 = scmp.eq.s32.totalorder %s178, 0
      %s181 = sadd.s32 %s180, 1
      %s182 = scalar_select %p179, %s180, %s181
      %p185 = pneg %p179
      %p186 = scmp.eq.s32.totalorder %s20, 17
      %p187 = por %p185, %p186
      %p188 = scmp.ne.s32.totalorder %s180, %s183
      %p189 = scmp.eq.s32.totalorder %s20, 0
      %p190 = por %p188, %p189
      %p191 = scmp.ne.s32.totalorder %s180, %s183
      %p192 = scmp.eq.s32.totalorder %s25, 17
      %p193 = por %p191, %p192
      %p194 = scmp.ne.s32.totalorder %s183, %s184
      %p195 = scmp.eq.s32.totalorder %s25, 0
      %p196 = por %p194, %p195
      %p197 = scmp.ne.s32.totalorder %s183, %s184
      %p198 = scmp.eq.s32.totalorder %s26, 17
      %p199 = por %p197, %p198
      %p201 = scmp.ne.s32.totalorder %s184, %s200
      %p202 = scmp.eq.s32.totalorder %s26, 0
      %p203 = por %p201, %p202
      %p204 = scmp.le.s32.totalorder 1, %s20
      %p205 = scmp.lt.s32.totalorder %s20, 19
      %p206 = pnand %p204, %p205
      %p207 = pneg %p206
      // Predicated region
      $region9: #{tpu_custom_call.1} parent=5 // pred_check
        _
      $region10: #{tpu_custom_call.1} parent=5 // pred_check_branch
        %209 = sbr.rel (%p206) target = $region12
      $region11: #{tpu_custom_call.1} parent=5 // pred_region
        %s210 = ssub.s32 %s20, 1
        // Predicated region
        $region13: #{tpu_custom_call.1} parent=11 // pred_check
          %p211 = pneg %p81
        $region14: #{tpu_custom_call.1} parent=11 // pred_check_branch
          %213 = sbr.rel (%p211) target = $region16
        $region15: #{tpu_custom_call.1} parent=11 // pred_region
          %215 = vsyncadd [#allocation6], 0
          %s216 = sshll.u32 %s1, 4
          %s217 = int_to_ptr.hbm [resolvable:$true] %s216
          %s218 = sshll.u32 [#allocation5], 4
          %s219 = int_to_ptr.vmem [resolvable:$true] %s218
          %224 = dma.hbm_to_vmem [thread:$0]  %s217, 6144, %s219, [#allocation6], 64, 64, 4
        $region16: #{tpu_custom_call.1} parent=11 // pred_fallthru
          _
        // Predicated region
        $region17: #{tpu_custom_call.1} parent=11 // pred_check
          %p225 = pneg %p102
        $region18: #{tpu_custom_call.1} parent=11 // pred_check_branch
          %227 = sbr.rel (%p225) target = $region20
        $region19: #{tpu_custom_call.1} parent=11 // pred_region
          %229 = vsyncadd [#allocation6], 0
          %s230 = sshll.u32 %s2, 4
          %s231 = int_to_ptr.hbm [resolvable:$true] %s230
          %s232 = sshll.u32 [#allocation7], 4
          %s233 = int_to_ptr.vmem [resolvable:$true] %s232
          %238 = dma.hbm_to_vmem [thread:$0]  %s231, 6144, %s233, [#allocation6], 64, 64, 4
        $region20: #{tpu_custom_call.1} parent=11 // pred_fallthru
          _
        // Predicated region
        $region21: #{tpu_custom_call.1} parent=11 // pred_check
          %p239 = pneg %p123
        $region22: #{tpu_custom_call.1} parent=11 // pred_check_branch
          %241 = sbr.rel (%p239) target = $region24
        $region23: #{tpu_custom_call.1} parent=11 // pred_region
          %243 = vsyncadd [#allocation9], 0
          %s244 = sshll.u32 %s3, 4
          %s245 = int_to_ptr.hbm [resolvable:$true] %s244
          %s246 = sshll.u32 [#allocation8], 4
          %s247 = int_to_ptr.vmem [resolvable:$true] %s246
          %252 = dma.hbm_to_vmem [thread:$0]  %s245, 6144, %s247, [#allocation9], 64, 64, 4
        $region24: #{tpu_custom_call.1} parent=11 // pred_fallthru
          _
        // Predicated region
        $region25: #{tpu_custom_call.1} parent=11 // pred_check
          %p253 = pneg %p170
        $region26: #{tpu_custom_call.1} parent=11 // pred_check_branch
          %255 = sbr.rel (%p253) target = $region28
        $region27: #{tpu_custom_call.1} parent=11 // pred_region
          %257 = vsyncadd [#allocation6], 0
          %s258 = sshll.u32 %s5, 4
          %s259 = int_to_ptr.hbm [resolvable:$true] %s258
          %s260 = sshll.u32 [#allocation11], 4
          %s261 = int_to_ptr.vmem [resolvable:$true] %s260
          %266 = dma.hbm_to_vmem [thread:$0]  %s259, 2048, %s261, [#allocation6], 128, 128, 8
        $region28: #{tpu_custom_call.1} parent=11 // pred_fallthru
          _
      $region12: #{tpu_custom_call.1} parent=5 // pred_fallthru
        _
      %p267 = scmp.lt.s32.totalorder %s20, 18
      // Predicated region
      $region29: #{tpu_custom_call.1} parent=5 // pred_check
        %p268 = pneg %p267
      $region30: #{tpu_custom_call.1} parent=5 // pred_check_branch
        %270 = sbr.rel (%p268) target = $region32
      $region31: #{tpu_custom_call.1} parent=5 // pred_region
        // Predicated region
        $region33: #{tpu_custom_call.1} parent=31 // pred_check
          %p271 = pneg %p54
        $region34: #{tpu_custom_call.1} parent=31 // pred_check_branch
          %273 = sbr.rel (%p271) target = $region36
        $region35: #{tpu_custom_call.1} parent=31 // pred_region
          %s274 = sand.u32 %s20, 1
          %s275 = scalar_lea.sflag [#allocation3], %s274
          %s276 = sand.u32 %s44, 1
          %s277 = smul.addr %s276, 128
          %s278 = scalar_lea.vmem [#allocation2], %s277
          %s279 = smul.u32 16, %s27
          %s280 = smul.u32 2, %s28
          %282 = vsyncadd %s275, 0
          %s283 = smul.addr %s279, 6
          %s284 = sadd.s32 %s280, %s283
          %s285 = smul.addr %s284, 4
          %s286 = scalar_lea.hbm %s0, %s285
          %s287 = sshll.u32 %s286, 4
          %s288 = int_to_ptr.hbm [resolvable:$true] %s287
          %s289 = sshll.u32 %s278, 4
          %s290 = int_to_ptr.vmem [resolvable:$true] %s289
          %295 = dma.hbm_to_vmem [thread:$0]  %s288, 2048, %s290, %s275, 384, 128, 8
        $region36: #{tpu_custom_call.1} parent=31 // pred_fallthru
          _
        // Predicated region
        $region37: #{tpu_custom_call.1} parent=31 // pred_check
          %p296 = pneg %p143
        $region38: #{tpu_custom_call.1} parent=31 // pred_check_branch
          %298 = sbr.rel (%p296) target = $region40
        $region39: #{tpu_custom_call.1} parent=31 // pred_region
          %s299 = sand.u32 %s20, 1
          %s300 = scalar_lea.sflag [#allocation3], %s299
          %s301 = sand.u32 %s133, 1
          %s302 = smul.addr %s301, 128
          %s303 = scalar_lea.vmem [#allocation10], %s302
          %s304 = smul.u32 16, %s27
          %306 = vsyncadd %s300, 0
          %s307 = smul.addr %s304, 8
          %s308 = scalar_lea.hbm %s4, %s307
          %s309 = sshll.u32 %s308, 4
          %s310 = int_to_ptr.hbm [resolvable:$true] %s309
          %s311 = sshll.u32 %s303, 4
          %s312 = int_to_ptr.vmem [resolvable:$true] %s311
          %317 = dma.hbm_to_vmem [thread:$0]  %s310, 2048, %s312, %s300, 128, 128, 8
        $region40: #{tpu_custom_call.1} parent=31 // pred_fallthru
          _
      $region32: #{tpu_custom_call.1} parent=5 // pred_fallthru
        _
      %p318 = scmp.le.s32.totalorder 1, %s20
      %p319 = scmp.lt.s32.totalorder %s20, 19
      %p320 = pnand %p318, %p319
      %p321 = pneg %p320
      // Predicated region
      $region41: #{tpu_custom_call.1} parent=5 // pred_check
        _
      $region42: #{tpu_custom_call.1} parent=5 // pred_check_branch
        %323 = sbr.rel (%p320) target = $region44
      $region43: #{tpu_custom_call.1} parent=5 // pred_region
        %s324 = ssub.s32 %s20, 1
        %s325 = sand.u32 %s25, 1
        %s326 = scalar_lea.sflag [#allocation3], %s325
        %s327 = sand.u32 %s47, 1
        %s328 = smul.addr %s327, 128
        %s329 = scalar_lea.vmem [#allocation2], %s328
        // Predicated region
        $region45: #{tpu_custom_call.1} parent=43 // pred_check
          %p330 = pneg %p60
        $region46: #{tpu_custom_call.1} parent=43 // pred_check_branch
          %332 = sbr.rel (%p330) target = $region48
        $region47: #{tpu_custom_call.1} parent=43 // pred_region
          %334 = dma.done %s326, 2048
        $region48: #{tpu_custom_call.1} parent=43 // pred_fallthru
          _
        // Predicated region
        $region49: #{tpu_custom_call.1} parent=43 // pred_check
          %p335 = pneg %p81
        $region50: #{tpu_custom_call.1} parent=43 // pred_check_branch
          %337 = sbr.rel (%p335) target = $region52
        $region51: #{tpu_custom_call.1} parent=43 // pred_region
          %339 = dma.done [#allocation6], 6144
        $region52: #{tpu_custom_call.1} parent=43 // pred_fallthru
          _
        // Predicated region
        $region53: #{tpu_custom_call.1} parent=43 // pred_check
          %p340 = pneg %p102
        $region54: #{tpu_custom_call.1} parent=43 // pred_check_branch
          %342 = sbr.rel (%p340) target = $region56
        $region55: #{tpu_custom_call.1} parent=43 // pred_region
          %344 = dma.done [#allocation6], 6144
        $region56: #{tpu_custom_call.1} parent=43 // pred_fallthru
          _
        // Predicated region
        $region57: #{tpu_custom_call.1} parent=43 // pred_check
          %p345 = pneg %p123
        $region58: #{tpu_custom_call.1} parent=43 // pred_check_branch
          %347 = sbr.rel (%p345) target = $region60
        $region59: #{tpu_custom_call.1} parent=43 // pred_region
          %349 = dma.done [#allocation9], 6144
        $region60: #{tpu_custom_call.1} parent=43 // pred_fallthru
          _
        %s350 = sand.u32 %s25, 1
        %s351 = scalar_lea.sflag [#allocation3], %s350
        %s352 = sand.u32 %s136, 1
        %s353 = smul.addr %s352, 128
        %s354 = scalar_lea.vmem [#allocation10], %s353
        // Predicated region
        $region61: #{tpu_custom_call.1} parent=43 // pred_check
          %p355 = pneg %p149
        $region62: #{tpu_custom_call.1} parent=43 // pred_check_branch
          %357 = sbr.rel (%p355) target = $region64
        $region63: #{tpu_custom_call.1} parent=43 // pred_region
          %359 = dma.done %s351, 2048
        $region64: #{tpu_custom_call.1} parent=43 // pred_fallthru
          _
        // Predicated region
        $region65: #{tpu_custom_call.1} parent=43 // pred_check
          %p360 = pneg %p170
        $region66: #{tpu_custom_call.1} parent=43 // pred_check_branch
          %362 = sbr.rel (%p360) target = $region68
        $region67: #{tpu_custom_call.1} parent=43 // pred_region
          %364 = dma.done [#allocation6], 2048
        $region68: #{tpu_custom_call.1} parent=43 // pred_fallthru
          _
        %s365 = sand.u32 %s25, 1
        %s366 = scalar_lea.sflag [#allocation3], %s365
        %s367 = sand.u32 %s47, 1
        %s368 = smul.addr %s367, 128
        %s369 = scalar_lea.vmem [#allocation2], %s368
        %p370 = pneg %p60
        %p371 = pneg %p57
        %p372 = pneg %p81
        %p373 = pneg %p78
        %p374 = pneg %p102
        %p375 = pneg %p99
        %p376 = pneg %p123
        %p377 = pneg %p120
        %s378 = sand.u32 %s25, 1
        %s379 = scalar_lea.sflag [#allocation3], %s378
        %s380 = sand.u32 %s136, 1
        %s381 = smul.addr %s380, 128
        %s382 = scalar_lea.vmem [#allocation10], %s381
        %p383 = pneg %p149
        %p384 = pneg %p146
        %p385 = pneg %p170
        %p386 = pneg %p167
        %p387 = pneg %p196
        %p388 = pneg %p193
        %s389 = sand.u32 %s183, 1
        %s390 = scalar_lea.sflag [#allocation4], %s389
        %s391 = sand.u32 %s183, 1
        %s392 = smul.addr %s391, 128
        %s393 = scalar_lea.vmem [#allocation12], %s392
        %s394 = smul.u32 16, %s29
        %s395 = smul.u32 2, %s30
        %s396 = smul.u32 16, %s29
        %s397 = smul.u32 16, %s29
        %p398 = scmp.eq.s32.totalorder %s30, 0
        // Predicated region
        $region69: #{tpu_custom_call.1} parent=43 // pred_check
          %p399 = pneg %p398
        $region70: #{tpu_custom_call.1} parent=43 // pred_check_branch
          %401 = sbr.rel (%p399) target = $region72
        $region71: #{tpu_custom_call.1} parent=43 // pred_region
          %402 = vst [vmem:[%s393] sm:$0xff] 0.0
          %403 = vst [vmem:[%s393 + $0x8] sm:$0xff] 0.0
          %404 = vst [vmem:[%s393 + $0x10] sm:$0xff] 0.0
          %405 = vst [vmem:[%s393 + $0x18] sm:$0xff] 0.0
          %406 = vst [vmem:[%s393 + $0x20] sm:$0xff] 0.0
          %407 = vst [vmem:[%s393 + $0x28] sm:$0xff] 0.0
          %408 = vst [vmem:[%s393 + $0x30] sm:$0xff] 0.0
          %409 = vst [vmem:[%s393 + $0x38] sm:$0xff] 0.0
          %410 = vst [vmem:[%s393 + $0x40] sm:$0xff] 0.0
          %411 = vst [vmem:[%s393 + $0x48] sm:$0xff] 0.0
          %412 = vst [vmem:[%s393 + $0x50] sm:$0xff] 0.0
          %413 = vst [vmem:[%s393 + $0x58] sm:$0xff] 0.0
          %414 = vst [vmem:[%s393 + $0x60] sm:$0xff] 0.0
          %415 = vst [vmem:[%s393 + $0x68] sm:$0xff] 0.0
          %416 = vst [vmem:[%s393 + $0x70] sm:$0xff] 0.0
          %417 = vst [vmem:[%s393 + $0x78] sm:$0xff] 0.0
        $region72: #{tpu_custom_call.1} parent=43 // pred_fallthru
          _
        %v418 = vld [vmem:[%s329] sm:$0xff]
        %v419 = vld [vmem:[%s329 + $0x8] sm:$0xff]
        %v420 = vld [vmem:[%s329 + $0x10] sm:$0xff]
        %v421 = vld [vmem:[%s329 + $0x18] sm:$0xff]
        %v422 = vld [vmem:[%s329 + $0x20] sm:$0xff]
        %v423 = vld [vmem:[%s329 + $0x28] sm:$0xff]
        %v424 = vld [vmem:[%s329 + $0x30] sm:$0xff]
        %v425 = vld [vmem:[%s329 + $0x38] sm:$0xff]
        %v426 = vld [vmem:[%s329 + $0x40] sm:$0xff]
        %v427 = vld [vmem:[%s329 + $0x48] sm:$0xff]
        %v428 = vld [vmem:[%s329 + $0x50] sm:$0xff]
        %v429 = vld [vmem:[%s329 + $0x58] sm:$0xff]
        %v430 = vld [vmem:[%s329 + $0x60] sm:$0xff]
        %v431 = vld [vmem:[%s329 + $0x68] sm:$0xff]
        %v432 = vld [vmem:[%s329 + $0x70] sm:$0xff]
        %v433 = vld [vmem:[%s329 + $0x78] sm:$0xff]
        %s434 = smul.u32 %s30, 256
        %s435 = sshra.s32 %s434, 3
        %s436 = sand.u32 %s434, 7
        %s437 = smul.addr %s435, 4
        %s438 = scalar_lea.vmem [#allocation5], %s437
        %v439 = vld [vmem:[%s438] sm:$0xf]
        %v440 = vld [vmem:[%s438 + $0x4] sm:$0xf]
        %v441 = vld [vmem:[%s438 + $0x8] sm:$0xf]
        %v442 = vld [vmem:[%s438 + $0xc] sm:$0xf]
        %v443 = vld [vmem:[%s438 + $0x10] sm:$0xf]
        %v444 = vld [vmem:[%s438 + $0x14] sm:$0xf]
        %v445 = vld [vmem:[%s438 + $0x18] sm:$0xf]
        %v446 = vld [vmem:[%s438 + $0x1c] sm:$0xf]
        %v447 = vld [vmem:[%s438 + $0x20] sm:$0xf]
        %v448 = vld [vmem:[%s438 + $0x24] sm:$0xf]
        %v449 = vld [vmem:[%s438 + $0x28] sm:$0xf]
        %v450 = vld [vmem:[%s438 + $0x2c] sm:$0xf]
        %v451 = vld [vmem:[%s438 + $0x30] sm:$0xf]
        %v452 = vld [vmem:[%s438 + $0x34] sm:$0xf]
        %v453 = vld [vmem:[%s438 + $0x38] sm:$0xf]
        %v454 = vld [vmem:[%s438 + $0x3c] sm:$0xf]
        %v455 = vld [vmem:[%s438 + $0x40] sm:$0xf]
        %v456 = vld [vmem:[%s438 + $0x44] sm:$0xf]
        %v457 = vld [vmem:[%s438 + $0x48] sm:$0xf]
        %v458 = vld [vmem:[%s438 + $0x4c] sm:$0xf]
        %v459 = vld [vmem:[%s438 + $0x50] sm:$0xf]
        %v460 = vld [vmem:[%s438 + $0x54] sm:$0xf]
        %v461 = vld [vmem:[%s438 + $0x58] sm:$0xf]
        %v462 = vld [vmem:[%s438 + $0x5c] sm:$0xf]
        %v463 = vld [vmem:[%s438 + $0x60] sm:$0xf]
        %v464 = vld [vmem:[%s438 + $0x64] sm:$0xf]
        %v465 = vld [vmem:[%s438 + $0x68] sm:$0xf]
        %v466 = vld [vmem:[%s438 + $0x6c] sm:$0xf]
        %v467 = vld [vmem:[%s438 + $0x70] sm:$0xf]
        %v468 = vld [vmem:[%s438 + $0x74] sm:$0xf]
        %v469 = vld [vmem:[%s438 + $0x78] sm:$0xf]
        %v470 = vld [vmem:[%s438 + $0x7c] sm:$0xf]
        %s471 = smul.addr %s435, 4
        %s472 = scalar_lea.vmem [#allocation7], %s471
        %v473 = vld [vmem:[%s472] sm:$0xf]
        %v474 = vld [vmem:[%s472 + $0x4] sm:$0xf]
        %v475 = vld [vmem:[%s472 + $0x8] sm:$0xf]
        %v476 = vld [vmem:[%s472 + $0xc] sm:$0xf]
        %v477 = vld [vmem:[%s472 + $0x10] sm:$0xf]
        %v478 = vld [vmem:[%s472 + $0x14] sm:$0xf]
        %v479 = vld [vmem:[%s472 + $0x18] sm:$0xf]
        %v480 = vld [vmem:[%s472 + $0x1c] sm:$0xf]
        %v481 = vld [vmem:[%s472 + $0x20] sm:$0xf]
        %v482 = vld [vmem:[%s472 + $0x24] sm:$0xf]
        %v483 = vld [vmem:[%s472 + $0x28] sm:$0xf]
        %v484 = vld [vmem:[%s472 + $0x2c] sm:$0xf]
        %v485 = vld [vmem:[%s472 + $0x30] sm:$0xf]
        %v486 = vld [vmem:[%s472 + $0x34] sm:$0xf]
        %v487 = vld [vmem:[%s472 + $0x38] sm:$0xf]
        %v488 = vld [vmem:[%s472 + $0x3c] sm:$0xf]
        %v489 = vld [vmem:[%s472 + $0x40] sm:$0xf]
        %v490 = vld [vmem:[%s472 + $0x44] sm:$0xf]
        %v491 = vld [vmem:[%s472 + $0x48] sm:$0xf]
        %v492 = vld [vmem:[%s472 + $0x4c] sm:$0xf]
        %v493 = vld [vmem:[%s472 + $0x50] sm:$0xf]
        %v494 = vld [vmem:[%s472 + $0x54] sm:$0xf]
        %v495 = vld [vmem:[%s472 + $0x58] sm:$0xf]
        %v496 = vld [vmem:[%s472 + $0x5c] sm:$0xf]
        %v497 = vld [vmem:[%s472 + $0x60] sm:$0xf]
        %v498 = vld [vmem:[%s472 + $0x64] sm:$0xf]
        %v499 = vld [vmem:[%s472 + $0x68] sm:$0xf]
        %v500 = vld [vmem:[%s472 + $0x6c] sm:$0xf]
        %v501 = vld [vmem:[%s472 + $0x70] sm:$0xf]
        %v502 = vld [vmem:[%s472 + $0x74] sm:$0xf]
        %v503 = vld [vmem:[%s472 + $0x78] sm:$0xf]
        %v504 = vld [vmem:[%s472 + $0x7c] sm:$0xf]
        %s505 = smul.addr %s435, 4
        %s506 = scalar_lea.vmem [#allocation8], %s505
        %v507 = vld [vmem:[%s506] sm:$0xf]
        %v508 = vld [vmem:[%s506 + $0x4] sm:$0xf]
        %v509 = vld [vmem:[%s506 + $0x8] sm:$0xf]
        %v510 = vld [vmem:[%s506 + $0xc] sm:$0xf]
        %v511 = vld [vmem:[%s506 + $0x10] sm:$0xf]
        %v512 = vld [vmem:[%s506 + $0x14] sm:$0xf]
        %v513 = vld [vmem:[%s506 + $0x18] sm:$0xf]
        %v514 = vld [vmem:[%s506 + $0x1c] sm:$0xf]
        %v515 = vld [vmem:[%s506 + $0x20] sm:$0xf]
        %v516 = vld [vmem:[%s506 + $0x24] sm:$0xf]
        %v517 = vld [vmem:[%s506 + $0x28] sm:$0xf]
        %v518 = vld [vmem:[%s506 + $0x2c] sm:$0xf]
        %v519 = vld [vmem:[%s506 + $0x30] sm:$0xf]
        %v520 = vld [vmem:[%s506 + $0x34] sm:$0xf]
        %v521 = vld [vmem:[%s506 + $0x38] sm:$0xf]
        %v522 = vld [vmem:[%s506 + $0x3c] sm:$0xf]
        %v523 = vld [vmem:[%s506 + $0x40] sm:$0xf]
        %v524 = vld [vmem:[%s506 + $0x44] sm:$0xf]
        %v525 = vld [vmem:[%s506 + $0x48] sm:$0xf]
        %v526 = vld [vmem:[%s506 + $0x4c] sm:$0xf]
        %v527 = vld [vmem:[%s506 + $0x50] sm:$0xf]
        %v528 = vld [vmem:[%s506 + $0x54] sm:$0xf]
        %v529 = vld [vmem:[%s506 + $0x58] sm:$0xf]
        %v530 = vld [vmem:[%s506 + $0x5c] sm:$0xf]
        %v531 = vld [vmem:[%s506 + $0x60] sm:$0xf]
        %v532 = vld [vmem:[%s506 + $0x64] sm:$0xf]
        %v533 = vld [vmem:[%s506 + $0x68] sm:$0xf]
        %v534 = vld [vmem:[%s506 + $0x6c] sm:$0xf]
        %v535 = vld [vmem:[%s506 + $0x70] sm:$0xf]
        %v536 = vld [vmem:[%s506 + $0x74] sm:$0xf]
        %v537 = vld [vmem:[%s506 + $0x78] sm:$0xf]
        %v538 = vld [vmem:[%s506 + $0x7c] sm:$0xf]
        %v539 = vld [vmem:[%s393] sm:$0xff]
        %v540 = vld [vmem:[%s393 + $0x8] sm:$0xff]
        %v541 = vld [vmem:[%s393 + $0x10] sm:$0xff]
        %v542 = vld [vmem:[%s393 + $0x18] sm:$0xff]
        %v543 = vld [vmem:[%s393 + $0x20] sm:$0xff]
        %v544 = vld [vmem:[%s393 + $0x28] sm:$0xff]
        %v545 = vld [vmem:[%s393 + $0x30] sm:$0xff]
        %v546 = vld [vmem:[%s393 + $0x38] sm:$0xff]
        %v547 = vld [vmem:[%s393 + $0x40] sm:$0xff]
        %v548 = vld [vmem:[%s393 + $0x48] sm:$0xff]
        %v549 = vld [vmem:[%s393 + $0x50] sm:$0xff]
        %v550 = vld [vmem:[%s393 + $0x58] sm:$0xff]
        %v551 = vld [vmem:[%s393 + $0x60] sm:$0xff]
        %v552 = vld [vmem:[%s393 + $0x68] sm:$0xff]
        %v553 = vld [vmem:[%s393 + $0x70] sm:$0xff]
        %v554 = vld [vmem:[%s393 + $0x78] sm:$0xff]
        %v571 = vunpack.c.l.b16 %v418
        %v572 = vunpack.c.h.b16 %v418
        %v573 = vunpack.c.l.b16 %v419
        %v574 = vunpack.c.h.b16 %v419
        %v575 = vunpack.c.l.b16 %v420
        %v576 = vunpack.c.h.b16 %v420
        %v577 = vunpack.c.l.b16 %v421
        %v578 = vunpack.c.h.b16 %v421
        %v579 = vunpack.c.l.b16 %v422
        %v580 = vunpack.c.h.b16 %v422
        %v581 = vunpack.c.l.b16 %v423
        %v582 = vunpack.c.h.b16 %v423
        %v583 = vunpack.c.l.b16 %v424
        %v584 = vunpack.c.h.b16 %v424
        %v585 = vunpack.c.l.b16 %v425
        %v586 = vunpack.c.h.b16 %v425
        %v587 = vunpack.c.l.b16 %v426
        %v588 = vunpack.c.h.b16 %v426
        %v589 = vunpack.c.l.b16 %v427
        %v590 = vunpack.c.h.b16 %v427
        %v591 = vunpack.c.l.b16 %v428
        %v592 = vunpack.c.h.b16 %v428
        %v593 = vunpack.c.l.b16 %v429
        %v594 = vunpack.c.h.b16 %v429
        %v595 = vunpack.c.l.b16 %v430
        %v596 = vunpack.c.h.b16 %v430
        %v597 = vunpack.c.l.b16 %v431
        %v598 = vunpack.c.h.b16 %v431
        %v599 = vunpack.c.l.b16 %v432
        %v600 = vunpack.c.h.b16 %v432
        %v601 = vunpack.c.l.b16 %v433
        %v602 = vunpack.c.h.b16 %v433
        %v603 = vpack.c.b16 %v573, %v571
        %v604 = vpack.c.b16 %v574, %v572
        %v605 = vpack.c.b16 %v577, %v575
        %v606 = vpack.c.b16 %v578, %v576
        %v607 = vpack.c.b16 %v581, %v579
        %v608 = vpack.c.b16 %v582, %v580
        %v609 = vpack.c.b16 %v585, %v583
        %v610 = vpack.c.b16 %v586, %v584
        %v611 = vpack.c.b16 %v589, %v587
        %v612 = vpack.c.b16 %v590, %v588
        %v613 = vpack.c.b16 %v593, %v591
        %v614 = vpack.c.b16 %v594, %v592
        %v615 = vpack.c.b16 %v597, %v595
        %v616 = vpack.c.b16 %v598, %v596
        %v617 = vpack.c.b16 %v601, %v599
        %v618 = vpack.c.b16 %v602, %v600
        %v667 = vunpack.c.l.b16 %v473
        %v668 = vunpack.c.l.b16 %v474
        %v669 = vunpack.c.l.b16 %v475
        %v670 = vunpack.c.l.b16 %v476
        %v671 = vunpack.c.l.b16 %v477
        %v672 = vunpack.c.l.b16 %v478
        %v673 = vunpack.c.l.b16 %v479
        %v674 = vunpack.c.l.b16 %v480
        %v675 = vunpack.c.l.b16 %v481
        %v676 = vunpack.c.l.b16 %v482
        %v677 = vunpack.c.l.b16 %v483
        %v678 = vunpack.c.l.b16 %v484
        %v679 = vunpack.c.l.b16 %v485
        %v680 = vunpack.c.l.b16 %v486
        %v681 = vunpack.c.l.b16 %v487
        %v682 = vunpack.c.l.b16 %v488
        %v683 = vunpack.c.l.b16 %v489
        %v684 = vunpack.c.l.b16 %v490
        %v685 = vunpack.c.l.b16 %v491
        %v686 = vunpack.c.l.b16 %v492
        %v687 = vunpack.c.l.b16 %v493
        %v688 = vunpack.c.l.b16 %v494
        %v689 = vunpack.c.l.b16 %v495
        %v690 = vunpack.c.l.b16 %v496
        %v691 = vunpack.c.l.b16 %v497
        %v692 = vunpack.c.l.b16 %v498
        %v693 = vunpack.c.l.b16 %v499
        %v694 = vunpack.c.l.b16 %v500
        %v695 = vunpack.c.l.b16 %v501
        %v696 = vunpack.c.l.b16 %v502
        %v697 = vunpack.c.l.b16 %v503
        %v698 = vunpack.c.l.b16 %v504
        %v699 = vpack.c.b16 %v668, %v667
        %v700 = vpack.c.b16 %v670, %v669
        %v701 = vpack.c.b16 %v672, %v671
        %v702 = vpack.c.b16 %v674, %v673
        %v703 = vpack.c.b16 %v676, %v675
        %v704 = vpack.c.b16 %v678, %v677
        %v705 = vpack.c.b16 %v680, %v679
        %v706 = vpack.c.b16 %v682, %v681
        %v707 = vpack.c.b16 %v684, %v683
        %v708 = vpack.c.b16 %v686, %v685
        %v709 = vpack.c.b16 %v688, %v687
        %v710 = vpack.c.b16 %v690, %v689
        %v711 = vpack.c.b16 %v692, %v691
        %v712 = vpack.c.b16 %v694, %v693
        %v713 = vpack.c.b16 %v696, %v695
        %v714 = vpack.c.b16 %v698, %v697
        %731 = vmatpush.bf16.msra.mxu0 %v706
        %732 = vmatpush.bf16.msra.mxu0 %v705
        %733 = vmatpush.bf16.msra.mxu0 %v704
        %734 = vmatpush.bf16.msra.mxu0 %v703
        %735 = vmatpush.bf16.msra.mxu0 %v702
        %736 = vmatpush.bf16.msra.mxu0 %v701
        %737 = vmatpush.bf16.msra.mxu0 %v700
        %738 = vmatpush.bf16.msra.mxu0 %v699
        %739 = vmatmul.bf16.gmra.mxu0 %v603
        %v740 = vpop.f32.mrf.mxu0
        %v741 = vadd.f32 0.0, %v740
        %v742 = vpop.f32.mrf.mxu0
        %v743 = vadd.f32 0.0, %v742
        %744 = vmatmul.bf16.gmra.mxu0 %v605
        %v745 = vpop.f32.mrf.mxu0
        %v746 = vadd.f32 0.0, %v745
        %v747 = vpop.f32.mrf.mxu0
        %v748 = vadd.f32 0.0, %v747
        %749 = vmatmul.bf16.gmra.mxu0 %v607
        %v750 = vpop.f32.mrf.mxu0
        %v751 = vadd.f32 0.0, %v750
        %v752 = vpop.f32.mrf.mxu0
        %v753 = vadd.f32 0.0, %v752
        %754 = vmatmul.bf16.gmra.mxu0 %v609
        %v755 = vpop.f32.mrf.mxu0
        %v756 = vadd.f32 0.0, %v755
        %v757 = vpop.f32.mrf.mxu0
        %v758 = vadd.f32 0.0, %v757
        %759 = vmatmul.bf16.gmra.mxu0 %v611
        %v760 = vpop.f32.mrf.mxu0
        %v761 = vadd.f32 0.0, %v760
        %v762 = vpop.f32.mrf.mxu0
        %v763 = vadd.f32 0.0, %v762
        %764 = vmatmul.bf16.gmra.mxu0 %v613
        %v765 = vpop.f32.mrf.mxu0
        %v766 = vadd.f32 0.0, %v765
        %v767 = vpop.f32.mrf.mxu0
        %v768 = vadd.f32 0.0, %v767
        %769 = vmatmul.bf16.gmra.mxu0 %v615
        %v770 = vpop.f32.mrf.mxu0
        %v771 = vadd.f32 0.0, %v770
        %v772 = vpop.f32.mrf.mxu0
        %v773 = vadd.f32 0.0, %v772
        %774 = vmatmul.bf16.gmra.mxu0 %v617
        %v775 = vpop.f32.mrf.mxu0
        %v776 = vadd.f32 0.0, %v775
        %v777 = vpop.f32.mrf.mxu0
        %v778 = vadd.f32 0.0, %v777
        %779 = vdwg.mxu0
        %780 = vmatpush.bf16.msra.mxu0 %v714
        %781 = vmatpush.bf16.msra.mxu0 %v713
        %782 = vmatpush.bf16.msra.mxu0 %v712
        %783 = vmatpush.bf16.msra.mxu0 %v711
        %784 = vmatpush.bf16.msra.mxu0 %v710
        %785 = vmatpush.bf16.msra.mxu0 %v709
        %786 = vmatpush.bf16.msra.mxu0 %v708
        %787 = vmatpush.bf16.msra.mxu0 %v707
        %788 = vmatmul.bf16.gmra.mxu0 %v604
        %v789 = vpop.f32.mrf.mxu0
        %v790 = vadd.f32 %v741, %v789
        %v791 = vpop.f32.mrf.mxu0
        %v792 = vadd.f32 %v743, %v791
        %793 = vmatmul.bf16.gmra.mxu0 %v606
        %v794 = vpop.f32.mrf.mxu0
        %v795 = vadd.f32 %v746, %v794
        %v796 = vpop.f32.mrf.mxu0
        %v797 = vadd.f32 %v748, %v796
        %798 = vmatmul.bf16.gmra.mxu0 %v608
        %v799 = vpop.f32.mrf.mxu0
        %v800 = vadd.f32 %v751, %v799
        %v801 = vpop.f32.mrf.mxu0
        %v802 = vadd.f32 %v753, %v801
        %803 = vmatmul.bf16.gmra.mxu0 %v610
        %v804 = vpop.f32.mrf.mxu0
        %v805 = vadd.f32 %v756, %v804
        %v806 = vpop.f32.mrf.mxu0
        %v807 = vadd.f32 %v758, %v806
        %808 = vmatmul.bf16.gmra.mxu0 %v612
        %v809 = vpop.f32.mrf.mxu0
        %v810 = vadd.f32 %v761, %v809
        %v811 = vpop.f32.mrf.mxu0
        %v812 = vadd.f32 %v763, %v811
        %813 = vmatmul.bf16.gmra.mxu0 %v614
        %v814 = vpop.f32.mrf.mxu0
        %v815 = vadd.f32 %v766, %v814
        %v816 = vpop.f32.mrf.mxu0
        %v817 = vadd.f32 %v768, %v816
        %818 = vmatmul.bf16.gmra.mxu0 %v616
        %v819 = vpop.f32.mrf.mxu0
        %v820 = vadd.f32 %v771, %v819
        %v821 = vpop.f32.mrf.mxu0
        %v822 = vadd.f32 %v773, %v821
        %823 = vmatmul.bf16.gmra.mxu0 %v618
        %v824 = vpop.f32.mrf.mxu0
        %v825 = vadd.f32 %v776, %v824
        %v826 = vpop.f32.mrf.mxu0
        %v827 = vadd.f32 %v778, %v826
        %828 = vdwg.mxu0
        %v861 = vunpack.c.l.b16 %v439
        %v862 = vunpack.c.l.b16 %v440
        %v863 = vunpack.c.l.b16 %v441
        %v864 = vunpack.c.l.b16 %v442
        %v865 = vunpack.c.l.b16 %v443
        %v866 = vunpack.c.l.b16 %v444
        %v867 = vunpack.c.l.b16 %v445
        %v868 = vunpack.c.l.b16 %v446
        %v869 = vunpack.c.l.b16 %v447
        %v870 = vunpack.c.l.b16 %v448
        %v871 = vunpack.c.l.b16 %v449
        %v872 = vunpack.c.l.b16 %v450
        %v873 = vunpack.c.l.b16 %v451
        %v874 = vunpack.c.l.b16 %v452
        %v875 = vunpack.c.l.b16 %v453
        %v876 = vunpack.c.l.b16 %v454
        %v877 = vunpack.c.l.b16 %v455
        %v878 = vunpack.c.l.b16 %v456
        %v879 = vunpack.c.l.b16 %v457
        %v880 = vunpack.c.l.b16 %v458
        %v881 = vunpack.c.l.b16 %v459
        %v882 = vunpack.c.l.b16 %v460
        %v883 = vunpack.c.l.b16 %v461
        %v884 = vunpack.c.l.b16 %v462
        %v885 = vunpack.c.l.b16 %v463
        %v886 = vunpack.c.l.b16 %v464
        %v887 = vunpack.c.l.b16 %v465
        %v888 = vunpack.c.l.b16 %v466
        %v889 = vunpack.c.l.b16 %v467
        %v890 = vunpack.c.l.b16 %v468
        %v891 = vunpack.c.l.b16 %v469
        %v892 = vunpack.c.l.b16 %v470
        %v893 = vpack.c.b16 %v862, %v861
        %v894 = vpack.c.b16 %v864, %v863
        %v895 = vpack.c.b16 %v866, %v865
        %v896 = vpack.c.b16 %v868, %v867
        %v897 = vpack.c.b16 %v870, %v869
        %v898 = vpack.c.b16 %v872, %v871
        %v899 = vpack.c.b16 %v874, %v873
        %v900 = vpack.c.b16 %v876, %v875
        %v901 = vpack.c.b16 %v878, %v877
        %v902 = vpack.c.b16 %v880, %v879
        %v903 = vpack.c.b16 %v882, %v881
        %v904 = vpack.c.b16 %v884, %v883
        %v905 = vpack.c.b16 %v886, %v885
        %v906 = vpack.c.b16 %v888, %v887
        %v907 = vpack.c.b16 %v890, %v889
        %v908 = vpack.c.b16 %v892, %v891
        %925 = vmatpush.bf16.msra.mxu0 %v900
        %926 = vmatpush.bf16.msra.mxu0 %v899
        %927 = vmatpush.bf16.msra.mxu0 %v898
        %928 = vmatpush.bf16.msra.mxu0 %v897
        %929 = vmatpush.bf16.msra.mxu0 %v896
        %930 = vmatpush.bf16.msra.mxu0 %v895
        %931 = vmatpush.bf16.msra.mxu0 %v894
        %932 = vmatpush.bf16.msra.mxu0 %v893
        %933 = vmatmul.bf16.gmra.mxu0 %v603
        %v934 = vpop.f32.mrf.mxu0
        %v935 = vadd.f32 %v790, %v934
        %v936 = vpop.f32.mrf.mxu0
        %v937 = vadd.f32 %v792, %v936
        %938 = vmatmul.bf16.gmra.mxu0 %v605
        %v939 = vpop.f32.mrf.mxu0
        %v940 = vadd.f32 %v795, %v939
        %v941 = vpop.f32.mrf.mxu0
        %v942 = vadd.f32 %v797, %v941
        %943 = vmatmul.bf16.gmra.mxu0 %v607
        %v944 = vpop.f32.mrf.mxu0
        %v945 = vadd.f32 %v800, %v944
        %v946 = vpop.f32.mrf.mxu0
        %v947 = vadd.f32 %v802, %v946
        %948 = vmatmul.bf16.gmra.mxu0 %v609
        %v949 = vpop.f32.mrf.mxu0
        %v950 = vadd.f32 %v805, %v949
        %v951 = vpop.f32.mrf.mxu0
        %v952 = vadd.f32 %v807, %v951
        %953 = vmatmul.bf16.gmra.mxu0 %v611
        %v954 = vpop.f32.mrf.mxu0
        %v955 = vadd.f32 %v810, %v954
        %v956 = vpop.f32.mrf.mxu0
        %v957 = vadd.f32 %v812, %v956
        %958 = vmatmul.bf16.gmra.mxu0 %v613
        %v959 = vpop.f32.mrf.mxu0
        %v960 = vadd.f32 %v815, %v959
        %v961 = vpop.f32.mrf.mxu0
        %v962 = vadd.f32 %v817, %v961
        %963 = vmatmul.bf16.gmra.mxu0 %v615
        %v964 = vpop.f32.mrf.mxu0
        %v965 = vadd.f32 %v820, %v964
        %v966 = vpop.f32.mrf.mxu0
        %v967 = vadd.f32 %v822, %v966
        %968 = vmatmul.bf16.gmra.mxu0 %v617
        %v969 = vpop.f32.mrf.mxu0
        %v970 = vadd.f32 %v825, %v969
        %v971 = vpop.f32.mrf.mxu0
        %v972 = vadd.f32 %v827, %v971
        %973 = vdwg.mxu0
        %974 = vmatpush.bf16.msra.mxu0 %v908
        %975 = vmatpush.bf16.msra.mxu0 %v907
        %976 = vmatpush.bf16.msra.mxu0 %v906
        %977 = vmatpush.bf16.msra.mxu0 %v905
        %978 = vmatpush.bf16.msra.mxu0 %v904
        %979 = vmatpush.bf16.msra.mxu0 %v903
        %980 = vmatpush.bf16.msra.mxu0 %v902
        %981 = vmatpush.bf16.msra.mxu0 %v901
        %982 = vmatmul.bf16.gmra.mxu0 %v604
        %v983 = vpop.f32.mrf.mxu0
        %v984 = vadd.f32 %v935, %v983
        %v985 = vpop.f32.mrf.mxu0
        %v986 = vadd.f32 %v937, %v985
        %987 = vmatmul.bf16.gmra.mxu0 %v606
        %v988 = vpop.f32.mrf.mxu0
        %v989 = vadd.f32 %v940, %v988
        %v990 = vpop.f32.mrf.mxu0
        %v991 = vadd.f32 %v942, %v990
        %992 = vmatmul.bf16.gmra.mxu0 %v608
        %v993 = vpop.f32.mrf.mxu0
        %v994 = vadd.f32 %v945, %v993
        %v995 = vpop.f32.mrf.mxu0
        %v996 = vadd.f32 %v947, %v995
        %997 = vmatmul.bf16.gmra.mxu0 %v610
        %v998 = vpop.f32.mrf.mxu0
        %v999 = vadd.f32 %v950, %v998
        %v1000 = vpop.f32.mrf.mxu0
        %v1001 = vadd.f32 %v952, %v1000
        %1002 = vmatmul.bf16.gmra.mxu0 %v612
        %v1003 = vpop.f32.mrf.mxu0
        %v1004 = vadd.f32 %v955, %v1003
        %v1005 = vpop.f32.mrf.mxu0
        %v1006 = vadd.f32 %v957, %v1005
        %1007 = vmatmul.bf16.gmra.mxu0 %v614
        %v1008 = vpop.f32.mrf.mxu0
        %v1009 = vadd.f32 %v960, %v1008
        %v1010 = vpop.f32.mrf.mxu0
        %v1011 = vadd.f32 %v962, %v1010
        %1012 = vmatmul.bf16.gmra.mxu0 %v616
        %v1013 = vpop.f32.mrf.mxu0
        %v1014 = vadd.f32 %v965, %v1013
        %v1015 = vpop.f32.mrf.mxu0
        %v1016 = vadd.f32 %v967, %v1015
        %1017 = vmatmul.bf16.gmra.mxu0 %v618
        %v1018 = vpop.f32.mrf.mxu0
        %v1019 = vadd.f32 %v970, %v1018
        %v1020 = vpop.f32.mrf.mxu0
        %v1021 = vadd.f32 %v972, %v1020
        %1022 = vdwg.mxu0
        %v1055 = vunpack.c.l.b16 %v507
        %v1056 = vunpack.c.l.b16 %v508
        %v1057 = vunpack.c.l.b16 %v509
        %v1058 = vunpack.c.l.b16 %v510
        %v1059 = vunpack.c.l.b16 %v511
        %v1060 = vunpack.c.l.b16 %v512
        %v1061 = vunpack.c.l.b16 %v513
        %v1062 = vunpack.c.l.b16 %v514
        %v1063 = vunpack.c.l.b16 %v515
        %v1064 = vunpack.c.l.b16 %v516
        %v1065 = vunpack.c.l.b16 %v517
        %v1066 = vunpack.c.l.b16 %v518
        %v1067 = vunpack.c.l.b16 %v519
        %v1068 = vunpack.c.l.b16 %v520
        %v1069 = vunpack.c.l.b16 %v521
        %v1070 = vunpack.c.l.b16 %v522
        %v1071 = vunpack.c.l.b16 %v523
        %v1072 = vunpack.c.l.b16 %v524
        %v1073 = vunpack.c.l.b16 %v525
        %v1074 = vunpack.c.l.b16 %v526
        %v1075 = vunpack.c.l.b16 %v527
        %v1076 = vunpack.c.l.b16 %v528
        %v1077 = vunpack.c.l.b16 %v529
        %v1078 = vunpack.c.l.b16 %v530
        %v1079 = vunpack.c.l.b16 %v531
        %v1080 = vunpack.c.l.b16 %v532
        %v1081 = vunpack.c.l.b16 %v533
        %v1082 = vunpack.c.l.b16 %v534
        %v1083 = vunpack.c.l.b16 %v535
        %v1084 = vunpack.c.l.b16 %v536
        %v1085 = vunpack.c.l.b16 %v537
        %v1086 = vunpack.c.l.b16 %v538
        %v1087 = vpack.c.b16 %v1056, %v1055
        %v1088 = vpack.c.b16 %v1058, %v1057
        %v1089 = vpack.c.b16 %v1060, %v1059
        %v1090 = vpack.c.b16 %v1062, %v1061
        %v1091 = vpack.c.b16 %v1064, %v1063
        %v1092 = vpack.c.b16 %v1066, %v1065
        %v1093 = vpack.c.b16 %v1068, %v1067
        %v1094 = vpack.c.b16 %v1070, %v1069
        %v1095 = vpack.c.b16 %v1072, %v1071
        %v1096 = vpack.c.b16 %v1074, %v1073
        %v1097 = vpack.c.b16 %v1076, %v1075
        %v1098 = vpack.c.b16 %v1078, %v1077
        %v1099 = vpack.c.b16 %v1080, %v1079
        %v1100 = vpack.c.b16 %v1082, %v1081
        %v1101 = vpack.c.b16 %v1084, %v1083
        %v1102 = vpack.c.b16 %v1086, %v1085
        %1119 = vmatpush.bf16.msra.mxu0 %v1094
        %1120 = vmatpush.bf16.msra.mxu0 %v1093
        %1121 = vmatpush.bf16.msra.mxu0 %v1092
        %1122 = vmatpush.bf16.msra.mxu0 %v1091
        %1123 = vmatpush.bf16.msra.mxu0 %v1090
        %1124 = vmatpush.bf16.msra.mxu0 %v1089
        %1125 = vmatpush.bf16.msra.mxu0 %v1088
        %1126 = vmatpush.bf16.msra.mxu0 %v1087
        %1127 = vmatmul.bf16.gmra.mxu0 %v603
        %v1128 = vpop.f32.mrf.mxu0
        %v1129 = vadd.f32 0.0, %v1128
        %v1130 = vpop.f32.mrf.mxu0
        %v1131 = vadd.f32 0.0, %v1130
        %1132 = vmatmul.bf16.gmra.mxu0 %v605
        %v1133 = vpop.f32.mrf.mxu0
        %v1134 = vadd.f32 0.0, %v1133
        %v1135 = vpop.f32.mrf.mxu0
        %v1136 = vadd.f32 0.0, %v1135
        %1137 = vmatmul.bf16.gmra.mxu0 %v607
        %v1138 = vpop.f32.mrf.mxu0
        %v1139 = vadd.f32 0.0, %v1138
        %v1140 = vpop.f32.mrf.mxu0
        %v1141 = vadd.f32 0.0, %v1140
        %1142 = vmatmul.bf16.gmra.mxu0 %v609
        %v1143 = vpop.f32.mrf.mxu0
        %v1144 = vadd.f32 0.0, %v1143
        %v1145 = vpop.f32.mrf.mxu0
        %v1146 = vadd.f32 0.0, %v1145
        %1147 = vmatmul.bf16.gmra.mxu0 %v611
        %v1148 = vpop.f32.mrf.mxu0
        %v1149 = vadd.f32 0.0, %v1148
        %v1150 = vpop.f32.mrf.mxu0
        %v1151 = vadd.f32 0.0, %v1150
        %1152 = vmatmul.bf16.gmra.mxu0 %v613
        %v1153 = vpop.f32.mrf.mxu0
        %v1154 = vadd.f32 0.0, %v1153
        %v1155 = vpop.f32.mrf.mxu0
        %v1156 = vadd.f32 0.0, %v1155
        %1157 = vmatmul.bf16.gmra.mxu0 %v615
        %v1158 = vpop.f32.mrf.mxu0
        %v1159 = vadd.f32 0.0, %v1158
        %v1160 = vpop.f32.mrf.mxu0
        %v1161 = vadd.f32 0.0, %v1160
        %1162 = vmatmul.bf16.gmra.mxu0 %v617
        %v1163 = vpop.f32.mrf.mxu0
        %v1164 = vadd.f32 0.0, %v1163
        %v1165 = vpop.f32.mrf.mxu0
        %v1166 = vadd.f32 0.0, %v1165
        %1167 = vdwg.mxu0
        %1168 = vmatpush.bf16.msra.mxu0 %v1102
        %1169 = vmatpush.bf16.msra.mxu0 %v1101
        %1170 = vmatpush.bf16.msra.mxu0 %v1100
        %1171 = vmatpush.bf16.msra.mxu0 %v1099
        %1172 = vmatpush.bf16.msra.mxu0 %v1098
        %1173 = vmatpush.bf16.msra.mxu0 %v1097
        %1174 = vmatpush.bf16.msra.mxu0 %v1096
        %1175 = vmatpush.bf16.msra.mxu0 %v1095
        %1176 = vmatmul.bf16.gmra.mxu0 %v604
        %v1177 = vpop.f32.mrf.mxu0
        %v1178 = vadd.f32 %v1129, %v1177
        %v1179 = vpop.f32.mrf.mxu0
        %v1180 = vadd.f32 %v1131, %v1179
        %1181 = vmatmul.bf16.gmra.mxu0 %v606
        %v1182 = vpop.f32.mrf.mxu0
        %v1183 = vadd.f32 %v1134, %v1182
        %v1184 = vpop.f32.mrf.mxu0
        %v1185 = vadd.f32 %v1136, %v1184
        %1186 = vmatmul.bf16.gmra.mxu0 %v608
        %v1187 = vpop.f32.mrf.mxu0
        %v1188 = vadd.f32 %v1139, %v1187
        %v1189 = vpop.f32.mrf.mxu0
        %v1190 = vadd.f32 %v1141, %v1189
        %1191 = vmatmul.bf16.gmra.mxu0 %v610
        %v1192 = vpop.f32.mrf.mxu0
        %v1193 = vadd.f32 %v1144, %v1192
        %v1194 = vpop.f32.mrf.mxu0
        %v1195 = vadd.f32 %v1146, %v1194
        %1196 = vmatmul.bf16.gmra.mxu0 %v612
        %v1197 = vpop.f32.mrf.mxu0
        %v1198 = vadd.f32 %v1149, %v1197
        %v1199 = vpop.f32.mrf.mxu0
        %v1200 = vadd.f32 %v1151, %v1199
        %1201 = vmatmul.bf16.gmra.mxu0 %v614
        %v1202 = vpop.f32.mrf.mxu0
        %v1203 = vadd.f32 %v1154, %v1202
        %v1204 = vpop.f32.mrf.mxu0
        %v1205 = vadd.f32 %v1156, %v1204
        %1206 = vmatmul.bf16.gmra.mxu0 %v616
        %v1207 = vpop.f32.mrf.mxu0
        %v1208 = vadd.f32 %v1159, %v1207
        %v1209 = vpop.f32.mrf.mxu0
        %v1210 = vadd.f32 %v1161, %v1209
        %1211 = vmatmul.bf16.gmra.mxu0 %v618
        %v1212 = vpop.f32.mrf.mxu0
        %v1213 = vadd.f32 %v1164, %v1212
        %v1214 = vpop.f32.mrf.mxu0
        %v1215 = vadd.f32 %v1166, %v1214
        %1216 = vdwg.mxu0
        %v1217 = vadd.f32 %v984, %v1178
        %v1218 = vadd.f32 %v986, %v1180
        %v1219 = vadd.f32 %v989, %v1183
        %v1220 = vadd.f32 %v991, %v1185
        %v1221 = vadd.f32 %v994, %v1188
        %v1222 = vadd.f32 %v996, %v1190
        %v1223 = vadd.f32 %v999, %v1193
        %v1224 = vadd.f32 %v1001, %v1195
        %v1225 = vadd.f32 %v1004, %v1198
        %v1226 = vadd.f32 %v1006, %v1200
        %v1227 = vadd.f32 %v1009, %v1203
        %v1228 = vadd.f32 %v1011, %v1205
        %v1229 = vadd.f32 %v1014, %v1208
        %v1230 = vadd.f32 %v1016, %v1210
        %v1231 = vadd.f32 %v1019, %v1213
        %v1232 = vadd.f32 %v1021, %v1215
        %v1233 = vadd.f32 %v539, %v1217
        %v1234 = vadd.f32 %v540, %v1218
        %v1235 = vadd.f32 %v541, %v1219
        %v1236 = vadd.f32 %v542, %v1220
        %v1237 = vadd.f32 %v543, %v1221
        %v1238 = vadd.f32 %v544, %v1222
        %v1239 = vadd.f32 %v545, %v1223
        %v1240 = vadd.f32 %v546, %v1224
        %v1241 = vadd.f32 %v547, %v1225
        %v1242 = vadd.f32 %v548, %v1226
        %v1243 = vadd.f32 %v549, %v1227
        %v1244 = vadd.f32 %v550, %v1228
        %v1245 = vadd.f32 %v551, %v1229
        %v1246 = vadd.f32 %v552, %v1230
        %v1247 = vadd.f32 %v553, %v1231
        %v1248 = vadd.f32 %v554, %v1232
        %1249 = vst [vmem:[%s393] sm:$0xff] %v1233
        %1250 = vst [vmem:[%s393 + $0x8] sm:$0xff] %v1234
        %1251 = vst [vmem:[%s393 + $0x10] sm:$0xff] %v1235
        %1252 = vst [vmem:[%s393 + $0x18] sm:$0xff] %v1236
        %1253 = vst [vmem:[%s393 + $0x20] sm:$0xff] %v1237
        %1254 = vst [vmem:[%s393 + $0x28] sm:$0xff] %v1238
        %1255 = vst [vmem:[%s393 + $0x30] sm:$0xff] %v1239
        %1256 = vst [vmem:[%s393 + $0x38] sm:$0xff] %v1240
        %1257 = vst [vmem:[%s393 + $0x40] sm:$0xff] %v1241
        %1258 = vst [vmem:[%s393 + $0x48] sm:$0xff] %v1242
        %1259 = vst [vmem:[%s393 + $0x50] sm:$0xff] %v1243
        %1260 = vst [vmem:[%s393 + $0x58] sm:$0xff] %v1244
        %1261 = vst [vmem:[%s393 + $0x60] sm:$0xff] %v1245
        %1262 = vst [vmem:[%s393 + $0x68] sm:$0xff] %v1246
        %1263 = vst [vmem:[%s393 + $0x70] sm:$0xff] %v1247
        %1264 = vst [vmem:[%s393 + $0x78] sm:$0xff] %v1248
        %p1265 = scmp.eq.s32.totalorder %s30, 2
        // Predicated region
        $region73: #{tpu_custom_call.1} parent=43 // pred_check
          %p1266 = pneg %p1265
        $region74: #{tpu_custom_call.1} parent=43 // pred_check_branch
          %1268 = sbr.rel (%p1266) target = $region76
        $region75: #{tpu_custom_call.1} parent=43 // pred_region
          %v1269 = vld [vmem:[%s393] sm:$0xff]
          %v1270 = vld [vmem:[%s393 + $0x8] sm:$0xff]
          %v1271 = vld [vmem:[%s393 + $0x10] sm:$0xff]
          %v1272 = vld [vmem:[%s393 + $0x18] sm:$0xff]
          %v1273 = vld [vmem:[%s393 + $0x20] sm:$0xff]
          %v1274 = vld [vmem:[%s393 + $0x28] sm:$0xff]
          %v1275 = vld [vmem:[%s393 + $0x30] sm:$0xff]
          %v1276 = vld [vmem:[%s393 + $0x38] sm:$0xff]
          %v1277 = vld [vmem:[%s393 + $0x40] sm:$0xff]
          %v1278 = vld [vmem:[%s393 + $0x48] sm:$0xff]
          %v1279 = vld [vmem:[%s393 + $0x50] sm:$0xff]
          %v1280 = vld [vmem:[%s393 + $0x58] sm:$0xff]
          %v1281 = vld [vmem:[%s393 + $0x60] sm:$0xff]
          %v1282 = vld [vmem:[%s393 + $0x68] sm:$0xff]
          %v1283 = vld [vmem:[%s393 + $0x70] sm:$0xff]
          %v1284 = vld [vmem:[%s393 + $0x78] sm:$0xff]
          %v1285 = vld [vmem:[%s354] sm:$0xff]
          %v1286 = vld [vmem:[%s354 + $0x8] sm:$0xff]
          %v1287 = vld [vmem:[%s354 + $0x10] sm:$0xff]
          %v1288 = vld [vmem:[%s354 + $0x18] sm:$0xff]
          %v1289 = vld [vmem:[%s354 + $0x20] sm:$0xff]
          %v1290 = vld [vmem:[%s354 + $0x28] sm:$0xff]
          %v1291 = vld [vmem:[%s354 + $0x30] sm:$0xff]
          %v1292 = vld [vmem:[%s354 + $0x38] sm:$0xff]
          %v1293 = vld [vmem:[%s354 + $0x40] sm:$0xff]
          %v1294 = vld [vmem:[%s354 + $0x48] sm:$0xff]
          %v1295 = vld [vmem:[%s354 + $0x50] sm:$0xff]
          %v1296 = vld [vmem:[%s354 + $0x58] sm:$0xff]
          %v1297 = vld [vmem:[%s354 + $0x60] sm:$0xff]
          %v1298 = vld [vmem:[%s354 + $0x68] sm:$0xff]
          %v1299 = vld [vmem:[%s354 + $0x70] sm:$0xff]
          %v1300 = vld [vmem:[%s354 + $0x78] sm:$0xff]
          %v1301 = vsub.f32 %v1269, %v1285
          %v1302 = vsub.f32 %v1270, %v1286
          %v1303 = vsub.f32 %v1271, %v1287
          %v1304 = vsub.f32 %v1272, %v1288
          %v1305 = vsub.f32 %v1273, %v1289
          %v1306 = vsub.f32 %v1274, %v1290
          %v1307 = vsub.f32 %v1275, %v1291
          %v1308 = vsub.f32 %v1276, %v1292
          %v1309 = vsub.f32 %v1277, %v1293
          %v1310 = vsub.f32 %v1278, %v1294
          %v1311 = vsub.f32 %v1279, %v1295
          %v1312 = vsub.f32 %v1280, %v1296
          %v1313 = vsub.f32 %v1281, %v1297
          %v1314 = vsub.f32 %v1282, %v1298
          %v1315 = vsub.f32 %v1283, %v1299
          %v1316 = vsub.f32 %v1284, %v1300
          %v1317 = vmul.f32 %v1301, %v1301
          %v1318 = vmul.f32 %v1302, %v1302
          %v1319 = vmul.f32 %v1303, %v1303
          %v1320 = vmul.f32 %v1304, %v1304
          %v1321 = vmul.f32 %v1305, %v1305
          %v1322 = vmul.f32 %v1306, %v1306
          %v1323 = vmul.f32 %v1307, %v1307
          %v1324 = vmul.f32 %v1308, %v1308
          %v1325 = vmul.f32 %v1309, %v1309
          %v1326 = vmul.f32 %v1310, %v1310
          %v1327 = vmul.f32 %v1311, %v1311
          %v1328 = vmul.f32 %v1312, %v1312
          %v1329 = vmul.f32 %v1313, %v1313
          %v1330 = vmul.f32 %v1314, %v1314
          %v1331 = vmul.f32 %v1315, %v1315
          %v1332 = vmul.f32 %v1316, %v1316
          %v1333 = vld [vmem:[#allocation11] sm:$0xff]
          %v1334 = vld [vmem:[#allocation11 + $0x8] sm:$0xff]
          %v1335 = vld [vmem:[#allocation11 + $0x10] sm:$0xff]
          %v1336 = vld [vmem:[#allocation11 + $0x18] sm:$0xff]
          %v1337 = vld [vmem:[#allocation11 + $0x20] sm:$0xff]
          %v1338 = vld [vmem:[#allocation11 + $0x28] sm:$0xff]
          %v1339 = vld [vmem:[#allocation11 + $0x30] sm:$0xff]
          %v1340 = vld [vmem:[#allocation11 + $0x38] sm:$0xff]
          %v1341 = vld [vmem:[#allocation11 + $0x40] sm:$0xff]
          %v1342 = vld [vmem:[#allocation11 + $0x48] sm:$0xff]
          %v1343 = vld [vmem:[#allocation11 + $0x50] sm:$0xff]
          %v1344 = vld [vmem:[#allocation11 + $0x58] sm:$0xff]
          %v1345 = vld [vmem:[#allocation11 + $0x60] sm:$0xff]
          %v1346 = vld [vmem:[#allocation11 + $0x68] sm:$0xff]
          %v1347 = vld [vmem:[#allocation11 + $0x70] sm:$0xff]
          %v1348 = vld [vmem:[#allocation11 + $0x78] sm:$0xff]
          %v1349 = vand.u32 %v1348, 4294901760
          %1350 = vmatpush.msra.mxu0 %v1349
          %v1351 = vand.u32 %v1347, 4294901760
          %1352 = vmatpush.msra.mxu0 %v1351
          %v1353 = vand.u32 %v1346, 4294901760
          %1354 = vmatpush.msra.mxu0 %v1353
          %v1355 = vand.u32 %v1345, 4294901760
          %1356 = vmatpush.msra.mxu0 %v1355
          %v1357 = vand.u32 %v1344, 4294901760
          %1358 = vmatpush.msra.mxu0 %v1357
          %v1359 = vand.u32 %v1343, 4294901760
          %1360 = vmatpush.msra.mxu0 %v1359
          %v1361 = vand.u32 %v1342, 4294901760
          %1362 = vmatpush.msra.mxu0 %v1361
          %v1363 = vand.u32 %v1341, 4294901760
          %1364 = vmatpush.msra.mxu0 %v1363
          %v1365 = vand.u32 %v1340, 4294901760
          %1366 = vmatpush.msra.mxu0 %v1365
          %v1367 = vand.u32 %v1339, 4294901760
          %1368 = vmatpush.msra.mxu0 %v1367
          %v1369 = vand.u32 %v1338, 4294901760
          %1370 = vmatpush.msra.mxu0 %v1369
          %v1371 = vand.u32 %v1337, 4294901760
          %1372 = vmatpush.msra.mxu0 %v1371
          %v1373 = vand.u32 %v1336, 4294901760
          %1374 = vmatpush.msra.mxu0 %v1373
          %v1375 = vand.u32 %v1335, 4294901760
          %1376 = vmatpush.msra.mxu0 %v1375
          %v1377 = vand.u32 %v1334, 4294901760
          %1378 = vmatpush.msra.mxu0 %v1377
          %v1379 = vand.u32 %v1333, 4294901760
          %1380 = vmatpush.msra.mxu0 %v1379
          %v1381 = vand.u32 %v1317, 4294901760
          %v1382 = vsub.f32 %v1317, %v1381
          %v1383 = vand.u32 %v1382, 4294901760
          %v1384 = vsub.f32 %v1382, %v1383
          %v1385 = vand.u32 %v1384, 4294901760
          %1386 = vmatmul.f32.gmra.mxu0 %v1385
          %v1387 = vpop.f32.mrf.mxu0
          %v1388 = vadd.f32 0.0, %v1387
          %v1389 = vand.u32 %v1318, 4294901760
          %v1390 = vsub.f32 %v1318, %v1389
          %v1391 = vand.u32 %v1390, 4294901760
          %v1392 = vsub.f32 %v1390, %v1391
          %v1393 = vand.u32 %v1392, 4294901760
          %1394 = vmatmul.f32.gmra.mxu0 %v1393
          %v1395 = vpop.f32.mrf.mxu0
          %v1396 = vadd.f32 0.0, %v1395
          %v1397 = vand.u32 %v1319, 4294901760
          %v1398 = vsub.f32 %v1319, %v1397
          %v1399 = vand.u32 %v1398, 4294901760
          %v1400 = vsub.f32 %v1398, %v1399
          %v1401 = vand.u32 %v1400, 4294901760
          %1402 = vmatmul.f32.gmra.mxu0 %v1401
          %v1403 = vpop.f32.mrf.mxu0
          %v1404 = vadd.f32 0.0, %v1403
          %v1405 = vand.u32 %v1320, 4294901760
          %v1406 = vsub.f32 %v1320, %v1405
          %v1407 = vand.u32 %v1406, 4294901760
          %v1408 = vsub.f32 %v1406, %v1407
          %v1409 = vand.u32 %v1408, 4294901760
          %1410 = vmatmul.f32.gmra.mxu0 %v1409
          %v1411 = vpop.f32.mrf.mxu0
          %v1412 = vadd.f32 0.0, %v1411
          %v1413 = vand.u32 %v1321, 4294901760
          %v1414 = vsub.f32 %v1321, %v1413
          %v1415 = vand.u32 %v1414, 4294901760
          %v1416 = vsub.f32 %v1414, %v1415
          %v1417 = vand.u32 %v1416, 4294901760
          %1418 = vmatmul.f32.gmra.mxu0 %v1417
          %v1419 = vpop.f32.mrf.mxu0
          %v1420 = vadd.f32 0.0, %v1419
          %v1421 = vand.u32 %v1322, 4294901760
          %v1422 = vsub.f32 %v1322, %v1421
          %v1423 = vand.u32 %v1422, 4294901760
          %v1424 = vsub.f32 %v1422, %v1423
          %v1425 = vand.u32 %v1424, 4294901760
          %1426 = vmatmul.f32.gmra.mxu0 %v1425
          %v1427 = vpop.f32.mrf.mxu0
          %v1428 = vadd.f32 0.0, %v1427
          %v1429 = vand.u32 %v1323, 4294901760
          %v1430 = vsub.f32 %v1323, %v1429
          %v1431 = vand.u32 %v1430, 4294901760
          %v1432 = vsub.f32 %v1430, %v1431
          %v1433 = vand.u32 %v1432, 4294901760
          %1434 = vmatmul.f32.gmra.mxu0 %v1433
          %v1435 = vpop.f32.mrf.mxu0
          %v1436 = vadd.f32 0.0, %v1435
          %v1437 = vand.u32 %v1324, 4294901760
          %v1438 = vsub.f32 %v1324, %v1437
          %v1439 = vand.u32 %v1438, 4294901760
          %v1440 = vsub.f32 %v1438, %v1439
          %v1441 = vand.u32 %v1440, 4294901760
          %1442 = vmatmul.f32.gmra.mxu0 %v1441
          %v1443 = vpop.f32.mrf.mxu0
          %v1444 = vadd.f32 0.0, %v1443
          %v1445 = vand.u32 %v1325, 4294901760
          %v1446 = vsub.f32 %v1325, %v1445
          %v1447 = vand.u32 %v1446, 4294901760
          %v1448 = vsub.f32 %v1446, %v1447
          %v1449 = vand.u32 %v1448, 4294901760
          %1450 = vmatmul.f32.gmra.mxu0 %v1449
          %v1451 = vpop.f32.mrf.mxu0
          %v1452 = vadd.f32 0.0, %v1451
          %v1453 = vand.u32 %v1326, 4294901760
          %v1454 = vsub.f32 %v1326, %v1453
          %v1455 = vand.u32 %v1454, 4294901760
          %v1456 = vsub.f32 %v1454, %v1455
          %v1457 = vand.u32 %v1456, 4294901760
          %1458 = vmatmul.f32.gmra.mxu0 %v1457
          %v1459 = vpop.f32.mrf.mxu0
          %v1460 = vadd.f32 0.0, %v1459
          %v1461 = vand.u32 %v1327, 4294901760
          %v1462 = vsub.f32 %v1327, %v1461
          %v1463 = vand.u32 %v1462, 4294901760
          %v1464 = vsub.f32 %v1462, %v1463
          %v1465 = vand.u32 %v1464, 4294901760
          %1466 = vmatmul.f32.gmra.mxu0 %v1465
          %v1467 = vpop.f32.mrf.mxu0
          %v1468 = vadd.f32 0.0, %v1467
          %v1469 = vand.u32 %v1328, 4294901760
          %v1470 = vsub.f32 %v1328, %v1469
          %v1471 = vand.u32 %v1470, 4294901760
          %v1472 = vsub.f32 %v1470, %v1471
          %v1473 = vand.u32 %v1472, 4294901760
          %1474 = vmatmul.f32.gmra.mxu0 %v1473
          %v1475 = vpop.f32.mrf.mxu0
          %v1476 = vadd.f32 0.0, %v1475
          %v1477 = vand.u32 %v1329, 4294901760
          %v1478 = vsub.f32 %v1329, %v1477
          %v1479 = vand.u32 %v1478, 4294901760
          %v1480 = vsub.f32 %v1478, %v1479
          %v1481 = vand.u32 %v1480, 4294901760
          %1482 = vmatmul.f32.gmra.mxu0 %v1481
          %v1483 = vpop.f32.mrf.mxu0
          %v1484 = vadd.f32 0.0, %v1483
          %v1485 = vand.u32 %v1330, 4294901760
          %v1486 = vsub.f32 %v1330, %v1485
          %v1487 = vand.u32 %v1486, 4294901760
          %v1488 = vsub.f32 %v1486, %v1487
          %v1489 = vand.u32 %v1488, 4294901760
          %1490 = vmatmul.f32.gmra.mxu0 %v1489
          %v1491 = vpop.f32.mrf.mxu0
          %v1492 = vadd.f32 0.0, %v1491
          %v1493 = vand.u32 %v1331, 4294901760
          %v1494 = vsub.f32 %v1331, %v1493
          %v1495 = vand.u32 %v1494, 4294901760
          %v1496 = vsub.f32 %v1494, %v1495
          %v1497 = vand.u32 %v1496, 4294901760
          %1498 = vmatmul.f32.gmra.mxu0 %v1497
          %v1499 = vpop.f32.mrf.mxu0
          %v1500 = vadd.f32 0.0, %v1499
          %v1501 = vand.u32 %v1332, 4294901760
          %v1502 = vsub.f32 %v1332, %v1501
          %v1503 = vand.u32 %v1502, 4294901760
          %v1504 = vsub.f32 %v1502, %v1503
          %v1505 = vand.u32 %v1504, 4294901760
          %1506 = vmatmul.f32.gmra.mxu0 %v1505
          %v1507 = vpop.f32.mrf.mxu0
          %v1508 = vadd.f32 0.0, %v1507
          %1509 = vdwg.mxu0
          %v1510 = vand.u32 %v1348, 4294901760
          %v1511 = vsub.f32 %v1348, %v1510
          %v1512 = vand.u32 %v1511, 4294901760
          %v1513 = vsub.f32 %v1511, %v1512
          %v1514 = vand.u32 %v1513, 4294901760
          %1515 = vmatpush.msra.mxu0 %v1514
          %v1516 = vand.u32 %v1347, 4294901760
          %v1517 = vsub.f32 %v1347, %v1516
          %v1518 = vand.u32 %v1517, 4294901760
          %v1519 = vsub.f32 %v1517, %v1518
          %v1520 = vand.u32 %v1519, 4294901760
          %1521 = vmatpush.msra.mxu0 %v1520
          %v1522 = vand.u32 %v1346, 4294901760
          %v1523 = vsub.f32 %v1346, %v1522
          %v1524 = vand.u32 %v1523, 4294901760
          %v1525 = vsub.f32 %v1523, %v1524
          %v1526 = vand.u32 %v1525, 4294901760
          %1527 = vmatpush.msra.mxu0 %v1526
          %v1528 = vand.u32 %v1345, 4294901760
          %v1529 = vsub.f32 %v1345, %v1528
          %v1530 = vand.u32 %v1529, 4294901760
          %v1531 = vsub.f32 %v1529, %v1530
          %v1532 = vand.u32 %v1531, 4294901760
          %1533 = vmatpush.msra.mxu0 %v1532
          %v1534 = vand.u32 %v1344, 4294901760
          %v1535 = vsub.f32 %v1344, %v1534
          %v1536 = vand.u32 %v1535, 4294901760
          %v1537 = vsub.f32 %v1535, %v1536
          %v1538 = vand.u32 %v1537, 4294901760
          %1539 = vmatpush.msra.mxu0 %v1538
          %v1540 = vand.u32 %v1343, 4294901760
          %v1541 = vsub.f32 %v1343, %v1540
          %v1542 = vand.u32 %v1541, 4294901760
          %v1543 = vsub.f32 %v1541, %v1542
          %v1544 = vand.u32 %v1543, 4294901760
          %1545 = vmatpush.msra.mxu0 %v1544
          %v1546 = vand.u32 %v1342, 4294901760
          %v1547 = vsub.f32 %v1342, %v1546
          %v1548 = vand.u32 %v1547, 4294901760
          %v1549 = vsub.f32 %v1547, %v1548
          %v1550 = vand.u32 %v1549, 4294901760
          %1551 = vmatpush.msra.mxu0 %v1550
          %v1552 = vand.u32 %v1341, 4294901760
          %v1553 = vsub.f32 %v1341, %v1552
          %v1554 = vand.u32 %v1553, 4294901760
          %v1555 = vsub.f32 %v1553, %v1554
          %v1556 = vand.u32 %v1555, 4294901760
          %1557 = vmatpush.msra.mxu0 %v1556
          %v1558 = vand.u32 %v1340, 4294901760
          %v1559 = vsub.f32 %v1340, %v1558
          %v1560 = vand.u32 %v1559, 4294901760
          %v1561 = vsub.f32 %v1559, %v1560
          %v1562 = vand.u32 %v1561, 4294901760
          %1563 = vmatpush.msra.mxu0 %v1562
          %v1564 = vand.u32 %v1339, 4294901760
          %v1565 = vsub.f32 %v1339, %v1564
          %v1566 = vand.u32 %v1565, 4294901760
          %v1567 = vsub.f32 %v1565, %v1566
          %v1568 = vand.u32 %v1567, 4294901760
          %1569 = vmatpush.msra.mxu0 %v1568
          %v1570 = vand.u32 %v1338, 4294901760
          %v1571 = vsub.f32 %v1338, %v1570
          %v1572 = vand.u32 %v1571, 4294901760
          %v1573 = vsub.f32 %v1571, %v1572
          %v1574 = vand.u32 %v1573, 4294901760
          %1575 = vmatpush.msra.mxu0 %v1574
          %v1576 = vand.u32 %v1337, 4294901760
          %v1577 = vsub.f32 %v1337, %v1576
          %v1578 = vand.u32 %v1577, 4294901760
          %v1579 = vsub.f32 %v1577, %v1578
          %v1580 = vand.u32 %v1579, 4294901760
          %1581 = vmatpush.msra.mxu0 %v1580
          %v1582 = vand.u32 %v1336, 4294901760
          %v1583 = vsub.f32 %v1336, %v1582
          %v1584 = vand.u32 %v1583, 4294901760
          %v1585 = vsub.f32 %v1583, %v1584
          %v1586 = vand.u32 %v1585, 4294901760
          %1587 = vmatpush.msra.mxu0 %v1586
          %v1588 = vand.u32 %v1335, 4294901760
          %v1589 = vsub.f32 %v1335, %v1588
          %v1590 = vand.u32 %v1589, 4294901760
          %v1591 = vsub.f32 %v1589, %v1590
          %v1592 = vand.u32 %v1591, 4294901760
          %1593 = vmatpush.msra.mxu0 %v1592
          %v1594 = vand.u32 %v1334, 4294901760
          %v1595 = vsub.f32 %v1334, %v1594
          %v1596 = vand.u32 %v1595, 4294901760
          %v1597 = vsub.f32 %v1595, %v1596
          %v1598 = vand.u32 %v1597, 4294901760
          %1599 = vmatpush.msra.mxu0 %v1598
          %v1600 = vand.u32 %v1333, 4294901760
          %v1601 = vsub.f32 %v1333, %v1600
          %v1602 = vand.u32 %v1601, 4294901760
          %v1603 = vsub.f32 %v1601, %v1602
          %v1604 = vand.u32 %v1603, 4294901760
          %1605 = vmatpush.msra.mxu0 %v1604
          %v1606 = vand.u32 %v1317, 4294901760
          %1607 = vmatmul.f32.gmra.mxu0 %v1606
          %v1608 = vpop.f32.mrf.mxu0
          %v1609 = vadd.f32 %v1388, %v1608
          %v1610 = vand.u32 %v1318, 4294901760
          %1611 = vmatmul.f32.gmra.mxu0 %v1610
          %v1612 = vpop.f32.mrf.mxu0
          %v1613 = vadd.f32 %v1396, %v1612
          %v1614 = vand.u32 %v1319, 4294901760
          %1615 = vmatmul.f32.gmra.mxu0 %v1614
          %v1616 = vpop.f32.mrf.mxu0
          %v1617 = vadd.f32 %v1404, %v1616
          %v1618 = vand.u32 %v1320, 4294901760
          %1619 = vmatmul.f32.gmra.mxu0 %v1618
          %v1620 = vpop.f32.mrf.mxu0
          %v1621 = vadd.f32 %v1412, %v1620
          %v1622 = vand.u32 %v1321, 4294901760
          %1623 = vmatmul.f32.gmra.mxu0 %v1622
          %v1624 = vpop.f32.mrf.mxu0
          %v1625 = vadd.f32 %v1420, %v1624
          %v1626 = vand.u32 %v1322, 4294901760
          %1627 = vmatmul.f32.gmra.mxu0 %v1626
          %v1628 = vpop.f32.mrf.mxu0
          %v1629 = vadd.f32 %v1428, %v1628
          %v1630 = vand.u32 %v1323, 4294901760
          %1631 = vmatmul.f32.gmra.mxu0 %v1630
          %v1632 = vpop.f32.mrf.mxu0
          %v1633 = vadd.f32 %v1436, %v1632
          %v1634 = vand.u32 %v1324, 4294901760
          %1635 = vmatmul.f32.gmra.mxu0 %v1634
          %v1636 = vpop.f32.mrf.mxu0
          %v1637 = vadd.f32 %v1444, %v1636
          %v1638 = vand.u32 %v1325, 4294901760
          %1639 = vmatmul.f32.gmra.mxu0 %v1638
          %v1640 = vpop.f32.mrf.mxu0
          %v1641 = vadd.f32 %v1452, %v1640
          %v1642 = vand.u32 %v1326, 4294901760
          %1643 = vmatmul.f32.gmra.mxu0 %v1642
          %v1644 = vpop.f32.mrf.mxu0
          %v1645 = vadd.f32 %v1460, %v1644
          %v1646 = vand.u32 %v1327, 4294901760
          %1647 = vmatmul.f32.gmra.mxu0 %v1646
          %v1648 = vpop.f32.mrf.mxu0
          %v1649 = vadd.f32 %v1468, %v1648
          %v1650 = vand.u32 %v1328, 4294901760
          %1651 = vmatmul.f32.gmra.mxu0 %v1650
          %v1652 = vpop.f32.mrf.mxu0
          %v1653 = vadd.f32 %v1476, %v1652
          %v1654 = vand.u32 %v1329, 4294901760
          %1655 = vmatmul.f32.gmra.mxu0 %v1654
          %v1656 = vpop.f32.mrf.mxu0
          %v1657 = vadd.f32 %v1484, %v1656
          %v1658 = vand.u32 %v1330, 4294901760
          %1659 = vmatmul.f32.gmra.mxu0 %v1658
          %v1660 = vpop.f32.mrf.mxu0
          %v1661 = vadd.f32 %v1492, %v1660
          %v1662 = vand.u32 %v1331, 4294901760
          %1663 = vmatmul.f32.gmra.mxu0 %v1662
          %v1664 = vpop.f32.mrf.mxu0
          %v1665 = vadd.f32 %v1500, %v1664
          %v1666 = vand.u32 %v1332, 4294901760
          %1667 = vmatmul.f32.gmra.mxu0 %v1666
          %v1668 = vpop.f32.mrf.mxu0
          %v1669 = vadd.f32 %v1508, %v1668
          %1670 = vdwg.mxu0
          %v1671 = vand.u32 %v1348, 4294901760
          %v1672 = vsub.f32 %v1348, %v1671
          %1673 = vmatpush.msra.mxu0 %v1672
          %v1674 = vand.u32 %v1347, 4294901760
          %v1675 = vsub.f32 %v1347, %v1674
          %1676 = vmatpush.msra.mxu0 %v1675
          %v1677 = vand.u32 %v1346, 4294901760
          %v1678 = vsub.f32 %v1346, %v1677
          %1679 = vmatpush.msra.mxu0 %v1678
          %v1680 = vand.u32 %v1345, 4294901760
          %v1681 = vsub.f32 %v1345, %v1680
          %1682 = vmatpush.msra.mxu0 %v1681
          %v1683 = vand.u32 %v1344, 4294901760
          %v1684 = vsub.f32 %v1344, %v1683
          %1685 = vmatpush.msra.mxu0 %v1684
          %v1686 = vand.u32 %v1343, 4294901760
          %v1687 = vsub.f32 %v1343, %v1686
          %1688 = vmatpush.msra.mxu0 %v1687
          %v1689 = vand.u32 %v1342, 4294901760
          %v1690 = vsub.f32 %v1342, %v1689
          %1691 = vmatpush.msra.mxu0 %v1690
          %v1692 = vand.u32 %v1341, 4294901760
          %v1693 = vsub.f32 %v1341, %v1692
          %1694 = vmatpush.msra.mxu0 %v1693
          %v1695 = vand.u32 %v1340, 4294901760
          %v1696 = vsub.f32 %v1340, %v1695
          %1697 = vmatpush.msra.mxu0 %v1696
          %v1698 = vand.u32 %v1339, 4294901760
          %v1699 = vsub.f32 %v1339, %v1698
          %1700 = vmatpush.msra.mxu0 %v1699
          %v1701 = vand.u32 %v1338, 4294901760
          %v1702 = vsub.f32 %v1338, %v1701
          %1703 = vmatpush.msra.mxu0 %v1702
          %v1704 = vand.u32 %v1337, 4294901760
          %v1705 = vsub.f32 %v1337, %v1704
          %1706 = vmatpush.msra.mxu0 %v1705
          %v1707 = vand.u32 %v1336, 4294901760
          %v1708 = vsub.f32 %v1336, %v1707
          %1709 = vmatpush.msra.mxu0 %v1708
          %v1710 = vand.u32 %v1335, 4294901760
          %v1711 = vsub.f32 %v1335, %v1710
          %1712 = vmatpush.msra.mxu0 %v1711
          %v1713 = vand.u32 %v1334, 4294901760
          %v1714 = vsub.f32 %v1334, %v1713
          %1715 = vmatpush.msra.mxu0 %v1714
          %v1716 = vand.u32 %v1333, 4294901760
          %v1717 = vsub.f32 %v1333, %v1716
          %1718 = vmatpush.msra.mxu0 %v1717
          %v1719 = vand.u32 %v1317, 4294901760
          %v1720 = vsub.f32 %v1317, %v1719
          %1721 = vmatmul.f32.gmra.mxu0 %v1720
          %v1722 = vpop.f32.mrf.mxu0
          %v1723 = vadd.f32 %v1609, %v1722
          %v1724 = vand.u32 %v1318, 4294901760
          %v1725 = vsub.f32 %v1318, %v1724
          %1726 = vmatmul.f32.gmra.mxu0 %v1725
          %v1727 = vpop.f32.mrf.mxu0
          %v1728 = vadd.f32 %v1613, %v1727
          %v1729 = vand.u32 %v1319, 4294901760
          %v1730 = vsub.f32 %v1319, %v1729
          %1731 = vmatmul.f32.gmra.mxu0 %v1730
          %v1732 = vpop.f32.mrf.mxu0
          %v1733 = vadd.f32 %v1617, %v1732
          %v1734 = vand.u32 %v1320, 4294901760
          %v1735 = vsub.f32 %v1320, %v1734
          %1736 = vmatmul.f32.gmra.mxu0 %v1735
          %v1737 = vpop.f32.mrf.mxu0
          %v1738 = vadd.f32 %v1621, %v1737
          %v1739 = vand.u32 %v1321, 4294901760
          %v1740 = vsub.f32 %v1321, %v1739
          %1741 = vmatmul.f32.gmra.mxu0 %v1740
          %v1742 = vpop.f32.mrf.mxu0
          %v1743 = vadd.f32 %v1625, %v1742
          %v1744 = vand.u32 %v1322, 4294901760
          %v1745 = vsub.f32 %v1322, %v1744
          %1746 = vmatmul.f32.gmra.mxu0 %v1745
          %v1747 = vpop.f32.mrf.mxu0
          %v1748 = vadd.f32 %v1629, %v1747
          %v1749 = vand.u32 %v1323, 4294901760
          %v1750 = vsub.f32 %v1323, %v1749
          %1751 = vmatmul.f32.gmra.mxu0 %v1750
          %v1752 = vpop.f32.mrf.mxu0
          %v1753 = vadd.f32 %v1633, %v1752
          %v1754 = vand.u32 %v1324, 4294901760
          %v1755 = vsub.f32 %v1324, %v1754
          %1756 = vmatmul.f32.gmra.mxu0 %v1755
          %v1757 = vpop.f32.mrf.mxu0
          %v1758 = vadd.f32 %v1637, %v1757
          %v1759 = vand.u32 %v1325, 4294901760
          %v1760 = vsub.f32 %v1325, %v1759
          %1761 = vmatmul.f32.gmra.mxu0 %v1760
          %v1762 = vpop.f32.mrf.mxu0
          %v1763 = vadd.f32 %v1641, %v1762
          %v1764 = vand.u32 %v1326, 4294901760
          %v1765 = vsub.f32 %v1326, %v1764
          %1766 = vmatmul.f32.gmra.mxu0 %v1765
          %v1767 = vpop.f32.mrf.mxu0
          %v1768 = vadd.f32 %v1645, %v1767
          %v1769 = vand.u32 %v1327, 4294901760
          %v1770 = vsub.f32 %v1327, %v1769
          %1771 = vmatmul.f32.gmra.mxu0 %v1770
          %v1772 = vpop.f32.mrf.mxu0
          %v1773 = vadd.f32 %v1649, %v1772
          %v1774 = vand.u32 %v1328, 4294901760
          %v1775 = vsub.f32 %v1328, %v1774
          %1776 = vmatmul.f32.gmra.mxu0 %v1775
          %v1777 = vpop.f32.mrf.mxu0
          %v1778 = vadd.f32 %v1653, %v1777
          %v1779 = vand.u32 %v1329, 4294901760
          %v1780 = vsub.f32 %v1329, %v1779
          %1781 = vmatmul.f32.gmra.mxu0 %v1780
          %v1782 = vpop.f32.mrf.mxu0
          %v1783 = vadd.f32 %v1657, %v1782
          %v1784 = vand.u32 %v1330, 4294901760
          %v1785 = vsub.f32 %v1330, %v1784
          %1786 = vmatmul.f32.gmra.mxu0 %v1785
          %v1787 = vpop.f32.mrf.mxu0
          %v1788 = vadd.f32 %v1661, %v1787
          %v1789 = vand.u32 %v1331, 4294901760
          %v1790 = vsub.f32 %v1331, %v1789
          %1791 = vmatmul.f32.gmra.mxu0 %v1790
          %v1792 = vpop.f32.mrf.mxu0
          %v1793 = vadd.f32 %v1665, %v1792
          %v1794 = vand.u32 %v1332, 4294901760
          %v1795 = vsub.f32 %v1332, %v1794
          %1796 = vmatmul.f32.gmra.mxu0 %v1795
          %v1797 = vpop.f32.mrf.mxu0
          %v1798 = vadd.f32 %v1669, %v1797
          %1799 = vdwg.mxu0
          %v1800 = vand.u32 %v1348, 4294901760
          %1801 = vmatpush.msra.mxu0 %v1800
          %v1802 = vand.u32 %v1347, 4294901760
          %1803 = vmatpush.msra.mxu0 %v1802
          %v1804 = vand.u32 %v1346, 4294901760
          %1805 = vmatpush.msra.mxu0 %v1804
          %v1806 = vand.u32 %v1345, 4294901760
          %1807 = vmatpush.msra.mxu0 %v1806
          %v1808 = vand.u32 %v1344, 4294901760
          %1809 = vmatpush.msra.mxu0 %v1808
          %v1810 = vand.u32 %v1343, 4294901760
          %1811 = vmatpush.msra.mxu0 %v1810
          %v1812 = vand.u32 %v1342, 4294901760
          %1813 = vmatpush.msra.mxu0 %v1812
          %v1814 = vand.u32 %v1341, 4294901760
          %1815 = vmatpush.msra.mxu0 %v1814
          %v1816 = vand.u32 %v1340, 4294901760
          %1817 = vmatpush.msra.mxu0 %v1816
          %v1818 = vand.u32 %v1339, 4294901760
          %1819 = vmatpush.msra.mxu0 %v1818
          %v1820 = vand.u32 %v1338, 4294901760
          %1821 = vmatpush.msra.mxu0 %v1820
          %v1822 = vand.u32 %v1337, 4294901760
          %1823 = vmatpush.msra.mxu0 %v1822
          %v1824 = vand.u32 %v1336, 4294901760
          %1825 = vmatpush.msra.mxu0 %v1824
          %v1826 = vand.u32 %v1335, 4294901760
          %1827 = vmatpush.msra.mxu0 %v1826
          %v1828 = vand.u32 %v1334, 4294901760
          %1829 = vmatpush.msra.mxu0 %v1828
          %v1830 = vand.u32 %v1333, 4294901760
          %1831 = vmatpush.msra.mxu0 %v1830
          %v1832 = vand.u32 %v1317, 4294901760
          %v1833 = vsub.f32 %v1317, %v1832
          %v1834 = vand.u32 %v1833, 4294901760
          %1835 = vmatmul.f32.gmra.mxu0 %v1834
          %v1836 = vpop.f32.mrf.mxu0
          %v1837 = vadd.f32 %v1723, %v1836
          %v1838 = vand.u32 %v1318, 4294901760
          %v1839 = vsub.f32 %v1318, %v1838
          %v1840 = vand.u32 %v1839, 4294901760
          %1841 = vmatmul.f32.gmra.mxu0 %v1840
          %v1842 = vpop.f32.mrf.mxu0
          %v1843 = vadd.f32 %v1728, %v1842
          %v1844 = vand.u32 %v1319, 4294901760
          %v1845 = vsub.f32 %v1319, %v1844
          %v1846 = vand.u32 %v1845, 4294901760
          %1847 = vmatmul.f32.gmra.mxu0 %v1846
          %v1848 = vpop.f32.mrf.mxu0
          %v1849 = vadd.f32 %v1733, %v1848
          %v1850 = vand.u32 %v1320, 4294901760
          %v1851 = vsub.f32 %v1320, %v1850
          %v1852 = vand.u32 %v1851, 4294901760
          %1853 = vmatmul.f32.gmra.mxu0 %v1852
          %v1854 = vpop.f32.mrf.mxu0
          %v1855 = vadd.f32 %v1738, %v1854
          %v1856 = vand.u32 %v1321, 4294901760
          %v1857 = vsub.f32 %v1321, %v1856
          %v1858 = vand.u32 %v1857, 4294901760
          %1859 = vmatmul.f32.gmra.mxu0 %v1858
          %v1860 = vpop.f32.mrf.mxu0
          %v1861 = vadd.f32 %v1743, %v1860
          %v1862 = vand.u32 %v1322, 4294901760
          %v1863 = vsub.f32 %v1322, %v1862
          %v1864 = vand.u32 %v1863, 4294901760
          %1865 = vmatmul.f32.gmra.mxu0 %v1864
          %v1866 = vpop.f32.mrf.mxu0
          %v1867 = vadd.f32 %v1748, %v1866
          %v1868 = vand.u32 %v1323, 4294901760
          %v1869 = vsub.f32 %v1323, %v1868
          %v1870 = vand.u32 %v1869, 4294901760
          %1871 = vmatmul.f32.gmra.mxu0 %v1870
          %v1872 = vpop.f32.mrf.mxu0
          %v1873 = vadd.f32 %v1753, %v1872
          %v1874 = vand.u32 %v1324, 4294901760
          %v1875 = vsub.f32 %v1324, %v1874
          %v1876 = vand.u32 %v1875, 4294901760
          %1877 = vmatmul.f32.gmra.mxu0 %v1876
          %v1878 = vpop.f32.mrf.mxu0
          %v1879 = vadd.f32 %v1758, %v1878
          %v1880 = vand.u32 %v1325, 4294901760
          %v1881 = vsub.f32 %v1325, %v1880
          %v1882 = vand.u32 %v1881, 4294901760
          %1883 = vmatmul.f32.gmra.mxu0 %v1882
          %v1884 = vpop.f32.mrf.mxu0
          %v1885 = vadd.f32 %v1763, %v1884
          %v1886 = vand.u32 %v1326, 4294901760
          %v1887 = vsub.f32 %v1326, %v1886
          %v1888 = vand.u32 %v1887, 4294901760
          %1889 = vmatmul.f32.gmra.mxu0 %v1888
          %v1890 = vpop.f32.mrf.mxu0
          %v1891 = vadd.f32 %v1768, %v1890
          %v1892 = vand.u32 %v1327, 4294901760
          %v1893 = vsub.f32 %v1327, %v1892
          %v1894 = vand.u32 %v1893, 4294901760
          %1895 = vmatmul.f32.gmra.mxu0 %v1894
          %v1896 = vpop.f32.mrf.mxu0
          %v1897 = vadd.f32 %v1773, %v1896
          %v1898 = vand.u32 %v1328, 4294901760
          %v1899 = vsub.f32 %v1328, %v1898
          %v1900 = vand.u32 %v1899, 4294901760
          %1901 = vmatmul.f32.gmra.mxu0 %v1900
          %v1902 = vpop.f32.mrf.mxu0
          %v1903 = vadd.f32 %v1778, %v1902
          %v1904 = vand.u32 %v1329, 4294901760
          %v1905 = vsub.f32 %v1329, %v1904
          %v1906 = vand.u32 %v1905, 4294901760
          %1907 = vmatmul.f32.gmra.mxu0 %v1906
          %v1908 = vpop.f32.mrf.mxu0
          %v1909 = vadd.f32 %v1783, %v1908
          %v1910 = vand.u32 %v1330, 4294901760
          %v1911 = vsub.f32 %v1330, %v1910
          %v1912 = vand.u32 %v1911, 4294901760
          %1913 = vmatmul.f32.gmra.mxu0 %v1912
          %v1914 = vpop.f32.mrf.mxu0
          %v1915 = vadd.f32 %v1788, %v1914
          %v1916 = vand.u32 %v1331, 4294901760
          %v1917 = vsub.f32 %v1331, %v1916
          %v1918 = vand.u32 %v1917, 4294901760
          %1919 = vmatmul.f32.gmra.mxu0 %v1918
          %v1920 = vpop.f32.mrf.mxu0
          %v1921 = vadd.f32 %v1793, %v1920
          %v1922 = vand.u32 %v1332, 4294901760
          %v1923 = vsub.f32 %v1332, %v1922
          %v1924 = vand.u32 %v1923, 4294901760
          %1925 = vmatmul.f32.gmra.mxu0 %v1924
          %v1926 = vpop.f32.mrf.mxu0
          %v1927 = vadd.f32 %v1798, %v1926
          %1928 = vdwg.mxu0
          %v1929 = vand.u32 %v1348, 4294901760
          %v1930 = vsub.f32 %v1348, %v1929
          %v1931 = vand.u32 %v1930, 4294901760
          %1932 = vmatpush.msra.mxu0 %v1931
          %v1933 = vand.u32 %v1347, 4294901760
          %v1934 = vsub.f32 %v1347, %v1933
          %v1935 = vand.u32 %v1934, 4294901760
          %1936 = vmatpush.msra.mxu0 %v1935
          %v1937 = vand.u32 %v1346, 4294901760
          %v1938 = vsub.f32 %v1346, %v1937
          %v1939 = vand.u32 %v1938, 4294901760
          %1940 = vmatpush.msra.mxu0 %v1939
          %v1941 = vand.u32 %v1345, 4294901760
          %v1942 = vsub.f32 %v1345, %v1941
          %v1943 = vand.u32 %v1942, 4294901760
          %1944 = vmatpush.msra.mxu0 %v1943
          %v1945 = vand.u32 %v1344, 4294901760
          %v1946 = vsub.f32 %v1344, %v1945
          %v1947 = vand.u32 %v1946, 4294901760
          %1948 = vmatpush.msra.mxu0 %v1947
          %v1949 = vand.u32 %v1343, 4294901760
          %v1950 = vsub.f32 %v1343, %v1949
          %v1951 = vand.u32 %v1950, 4294901760
          %1952 = vmatpush.msra.mxu0 %v1951
          %v1953 = vand.u32 %v1342, 4294901760
          %v1954 = vsub.f32 %v1342, %v1953
          %v1955 = vand.u32 %v1954, 4294901760
          %1956 = vmatpush.msra.mxu0 %v1955
          %v1957 = vand.u32 %v1341, 4294901760
          %v1958 = vsub.f32 %v1341, %v1957
          %v1959 = vand.u32 %v1958, 4294901760
          %1960 = vmatpush.msra.mxu0 %v1959
          %v1961 = vand.u32 %v1340, 4294901760
          %v1962 = vsub.f32 %v1340, %v1961
          %v1963 = vand.u32 %v1962, 4294901760
          %1964 = vmatpush.msra.mxu0 %v1963
          %v1965 = vand.u32 %v1339, 4294901760
          %v1966 = vsub.f32 %v1339, %v1965
          %v1967 = vand.u32 %v1966, 4294901760
          %1968 = vmatpush.msra.mxu0 %v1967
          %v1969 = vand.u32 %v1338, 4294901760
          %v1970 = vsub.f32 %v1338, %v1969
          %v1971 = vand.u32 %v1970, 4294901760
          %1972 = vmatpush.msra.mxu0 %v1971
          %v1973 = vand.u32 %v1337, 4294901760
          %v1974 = vsub.f32 %v1337, %v1973
          %v1975 = vand.u32 %v1974, 4294901760
          %1976 = vmatpush.msra.mxu0 %v1975
          %v1977 = vand.u32 %v1336, 4294901760
          %v1978 = vsub.f32 %v1336, %v1977
          %v1979 = vand.u32 %v1978, 4294901760
          %1980 = vmatpush.msra.mxu0 %v1979
          %v1981 = vand.u32 %v1335, 4294901760
          %v1982 = vsub.f32 %v1335, %v1981
          %v1983 = vand.u32 %v1982, 4294901760
          %1984 = vmatpush.msra.mxu0 %v1983
          %v1985 = vand.u32 %v1334, 4294901760
          %v1986 = vsub.f32 %v1334, %v1985
          %v1987 = vand.u32 %v1986, 4294901760
          %1988 = vmatpush.msra.mxu0 %v1987
          %v1989 = vand.u32 %v1333, 4294901760
          %v1990 = vsub.f32 %v1333, %v1989
          %v1991 = vand.u32 %v1990, 4294901760
          %1992 = vmatpush.msra.mxu0 %v1991
          %v1993 = vand.u32 %v1317, 4294901760
          %1994 = vmatmul.f32.gmra.mxu0 %v1993
          %v1995 = vpop.f32.mrf.mxu0
          %v1996 = vadd.f32 %v1837, %v1995
          %v1997 = vand.u32 %v1318, 4294901760
          %1998 = vmatmul.f32.gmra.mxu0 %v1997
          %v1999 = vpop.f32.mrf.mxu0
          %v2000 = vadd.f32 %v1843, %v1999
          %v2001 = vand.u32 %v1319, 4294901760
          %2002 = vmatmul.f32.gmra.mxu0 %v2001
          %v2003 = vpop.f32.mrf.mxu0
          %v2004 = vadd.f32 %v1849, %v2003
          %v2005 = vand.u32 %v1320, 4294901760
          %2006 = vmatmul.f32.gmra.mxu0 %v2005
          %v2007 = vpop.f32.mrf.mxu0
          %v2008 = vadd.f32 %v1855, %v2007
          %v2009 = vand.u32 %v1321, 4294901760
          %2010 = vmatmul.f32.gmra.mxu0 %v2009
          %v2011 = vpop.f32.mrf.mxu0
          %v2012 = vadd.f32 %v1861, %v2011
          %v2013 = vand.u32 %v1322, 4294901760
          %2014 = vmatmul.f32.gmra.mxu0 %v2013
          %v2015 = vpop.f32.mrf.mxu0
          %v2016 = vadd.f32 %v1867, %v2015
          %v2017 = vand.u32 %v1323, 4294901760
          %2018 = vmatmul.f32.gmra.mxu0 %v2017
          %v2019 = vpop.f32.mrf.mxu0
          %v2020 = vadd.f32 %v1873, %v2019
          %v2021 = vand.u32 %v1324, 4294901760
          %2022 = vmatmul.f32.gmra.mxu0 %v2021
          %v2023 = vpop.f32.mrf.mxu0
          %v2024 = vadd.f32 %v1879, %v2023
          %v2025 = vand.u32 %v1325, 4294901760
          %2026 = vmatmul.f32.gmra.mxu0 %v2025
          %v2027 = vpop.f32.mrf.mxu0
          %v2028 = vadd.f32 %v1885, %v2027
          %v2029 = vand.u32 %v1326, 4294901760
          %2030 = vmatmul.f32.gmra.mxu0 %v2029
          %v2031 = vpop.f32.mrf.mxu0
          %v2032 = vadd.f32 %v1891, %v2031
          %v2033 = vand.u32 %v1327, 4294901760
          %2034 = vmatmul.f32.gmra.mxu0 %v2033
          %v2035 = vpop.f32.mrf.mxu0
          %v2036 = vadd.f32 %v1897, %v2035
          %v2037 = vand.u32 %v1328, 4294901760
          %2038 = vmatmul.f32.gmra.mxu0 %v2037
          %v2039 = vpop.f32.mrf.mxu0
          %v2040 = vadd.f32 %v1903, %v2039
          %v2041 = vand.u32 %v1329, 4294901760
          %2042 = vmatmul.f32.gmra.mxu0 %v2041
          %v2043 = vpop.f32.mrf.mxu0
          %v2044 = vadd.f32 %v1909, %v2043
          %v2045 = vand.u32 %v1330, 4294901760
          %2046 = vmatmul.f32.gmra.mxu0 %v2045
          %v2047 = vpop.f32.mrf.mxu0
          %v2048 = vadd.f32 %v1915, %v2047
          %v2049 = vand.u32 %v1331, 4294901760
          %2050 = vmatmul.f32.gmra.mxu0 %v2049
          %v2051 = vpop.f32.mrf.mxu0
          %v2052 = vadd.f32 %v1921, %v2051
          %v2053 = vand.u32 %v1332, 4294901760
          %2054 = vmatmul.f32.gmra.mxu0 %v2053
          %v2055 = vpop.f32.mrf.mxu0
          %v2056 = vadd.f32 %v1927, %v2055
          %2057 = vdwg.mxu0
          %v2058 = vand.u32 %v1348, 4294901760
          %2059 = vmatpush.msra.mxu0 %v2058
          %v2060 = vand.u32 %v1347, 4294901760
          %2061 = vmatpush.msra.mxu0 %v2060
          %v2062 = vand.u32 %v1346, 4294901760
          %2063 = vmatpush.msra.mxu0 %v2062
          %v2064 = vand.u32 %v1345, 4294901760
          %2065 = vmatpush.msra.mxu0 %v2064
          %v2066 = vand.u32 %v1344, 4294901760
          %2067 = vmatpush.msra.mxu0 %v2066
          %v2068 = vand.u32 %v1343, 4294901760
          %2069 = vmatpush.msra.mxu0 %v2068
          %v2070 = vand.u32 %v1342, 4294901760
          %2071 = vmatpush.msra.mxu0 %v2070
          %v2072 = vand.u32 %v1341, 4294901760
          %2073 = vmatpush.msra.mxu0 %v2072
          %v2074 = vand.u32 %v1340, 4294901760
          %2075 = vmatpush.msra.mxu0 %v2074
          %v2076 = vand.u32 %v1339, 4294901760
          %2077 = vmatpush.msra.mxu0 %v2076
          %v2078 = vand.u32 %v1338, 4294901760
          %2079 = vmatpush.msra.mxu0 %v2078
          %v2080 = vand.u32 %v1337, 4294901760
          %2081 = vmatpush.msra.mxu0 %v2080
          %v2082 = vand.u32 %v1336, 4294901760
          %2083 = vmatpush.msra.mxu0 %v2082
          %v2084 = vand.u32 %v1335, 4294901760
          %2085 = vmatpush.msra.mxu0 %v2084
          %v2086 = vand.u32 %v1334, 4294901760
          %2087 = vmatpush.msra.mxu0 %v2086
          %v2088 = vand.u32 %v1333, 4294901760
          %2089 = vmatpush.msra.mxu0 %v2088
          %v2090 = vand.u32 %v1317, 4294901760
          %2091 = vmatmul.f32.gmra.mxu0 %v2090
          %v2092 = vpop.f32.mrf.mxu0
          %v2093 = vadd.f32 %v1996, %v2092
          %v2094 = vand.u32 %v1318, 4294901760
          %2095 = vmatmul.f32.gmra.mxu0 %v2094
          %v2096 = vpop.f32.mrf.mxu0
          %v2097 = vadd.f32 %v2000, %v2096
          %v2098 = vand.u32 %v1319, 4294901760
          %2099 = vmatmul.f32.gmra.mxu0 %v2098
          %v2100 = vpop.f32.mrf.mxu0
          %v2101 = vadd.f32 %v2004, %v2100
          %v2102 = vand.u32 %v1320, 4294901760
          %2103 = vmatmul.f32.gmra.mxu0 %v2102
          %v2104 = vpop.f32.mrf.mxu0
          %v2105 = vadd.f32 %v2008, %v2104
          %v2106 = vand.u32 %v1321, 4294901760
          %2107 = vmatmul.f32.gmra.mxu0 %v2106
          %v2108 = vpop.f32.mrf.mxu0
          %v2109 = vadd.f32 %v2012, %v2108
          %v2110 = vand.u32 %v1322, 4294901760
          %2111 = vmatmul.f32.gmra.mxu0 %v2110
          %v2112 = vpop.f32.mrf.mxu0
          %v2113 = vadd.f32 %v2016, %v2112
          %v2114 = vand.u32 %v1323, 4294901760
          %2115 = vmatmul.f32.gmra.mxu0 %v2114
          %v2116 = vpop.f32.mrf.mxu0
          %v2117 = vadd.f32 %v2020, %v2116
          %v2118 = vand.u32 %v1324, 4294901760
          %2119 = vmatmul.f32.gmra.mxu0 %v2118
          %v2120 = vpop.f32.mrf.mxu0
          %v2121 = vadd.f32 %v2024, %v2120
          %v2122 = vand.u32 %v1325, 4294901760
          %2123 = vmatmul.f32.gmra.mxu0 %v2122
          %v2124 = vpop.f32.mrf.mxu0
          %v2125 = vadd.f32 %v2028, %v2124
          %v2126 = vand.u32 %v1326, 4294901760
          %2127 = vmatmul.f32.gmra.mxu0 %v2126
          %v2128 = vpop.f32.mrf.mxu0
          %v2129 = vadd.f32 %v2032, %v2128
          %v2130 = vand.u32 %v1327, 4294901760
          %2131 = vmatmul.f32.gmra.mxu0 %v2130
          %v2132 = vpop.f32.mrf.mxu0
          %v2133 = vadd.f32 %v2036, %v2132
          %v2134 = vand.u32 %v1328, 4294901760
          %2135 = vmatmul.f32.gmra.mxu0 %v2134
          %v2136 = vpop.f32.mrf.mxu0
          %v2137 = vadd.f32 %v2040, %v2136
          %v2138 = vand.u32 %v1329, 4294901760
          %2139 = vmatmul.f32.gmra.mxu0 %v2138
          %v2140 = vpop.f32.mrf.mxu0
          %v2141 = vadd.f32 %v2044, %v2140
          %v2142 = vand.u32 %v1330, 4294901760
          %2143 = vmatmul.f32.gmra.mxu0 %v2142
          %v2144 = vpop.f32.mrf.mxu0
          %v2145 = vadd.f32 %v2048, %v2144
          %v2146 = vand.u32 %v1331, 4294901760
          %2147 = vmatmul.f32.gmra.mxu0 %v2146
          %v2148 = vpop.f32.mrf.mxu0
          %v2149 = vadd.f32 %v2052, %v2148
          %v2150 = vand.u32 %v1332, 4294901760
          %2151 = vmatmul.f32.gmra.mxu0 %v2150
          %v2152 = vpop.f32.mrf.mxu0
          %v2153 = vadd.f32 %v2056, %v2152
          %2154 = vdwg.mxu0
          %v2155 = vlaneseq
          %v2156 = vand.u32 %v2155, 127
          %v2157 = vand.u32 2147483647, %v2093
          %v2158 = vand.u32 2147483647, %v2097
          %v2159 = vand.u32 2147483647, %v2101
          %v2160 = vand.u32 2147483647, %v2105
          %v2161 = vand.u32 2147483647, %v2109
          %v2162 = vand.u32 2147483647, %v2113
          %v2163 = vand.u32 2147483647, %v2117
          %v2164 = vand.u32 2147483647, %v2121
          %v2165 = vand.u32 2147483647, %v2125
          %v2166 = vand.u32 2147483647, %v2129
          %v2167 = vand.u32 2147483647, %v2133
          %v2168 = vand.u32 2147483647, %v2137
          %v2169 = vand.u32 2147483647, %v2141
          %v2170 = vand.u32 2147483647, %v2145
          %v2171 = vand.u32 2147483647, %v2149
          %v2172 = vand.u32 2147483647, %v2153
          %2174 = vset.pattern.permute.xlu0 16
          %2175 = vperm.xlu0 %2174, %v1269
          %v2176 = vpop.permute.xlu0 %2175
          %2179 = vset.pattern.permute.xlu0 16
          %2180 = vperm.xlu0 %2179, %v1270
          %v2181 = vpop.permute.xlu0 %2180
          %2184 = vset.pattern.permute.xlu0 16
          %2185 = vperm.xlu0 %2184, %v1271
          %v2186 = vpop.permute.xlu0 %2185
          %2189 = vset.pattern.permute.xlu0 16
          %2190 = vperm.xlu0 %2189, %v1272
          %v2191 = vpop.permute.xlu0 %2190
          %2194 = vset.pattern.permute.xlu0 16
          %2195 = vperm.xlu0 %2194, %v1273
          %v2196 = vpop.permute.xlu0 %2195
          %2199 = vset.pattern.permute.xlu0 16
          %2200 = vperm.xlu0 %2199, %v1274
          %v2201 = vpop.permute.xlu0 %2200
          %2204 = vset.pattern.permute.xlu0 16
          %2205 = vperm.xlu0 %2204, %v1275
          %v2206 = vpop.permute.xlu0 %2205
          %2209 = vset.pattern.permute.xlu0 16
          %2210 = vperm.xlu0 %2209, %v1276
          %v2211 = vpop.permute.xlu0 %2210
          %2214 = vset.pattern.permute.xlu0 16
          %2215 = vperm.xlu0 %2214, %v1277
          %v2216 = vpop.permute.xlu0 %2215
          %2219 = vset.pattern.permute.xlu0 16
          %2220 = vperm.xlu0 %2219, %v1278
          %v2221 = vpop.permute.xlu0 %2220
          %2224 = vset.pattern.permute.xlu0 16
          %2225 = vperm.xlu0 %2224, %v1279
          %v2226 = vpop.permute.xlu0 %2225
          %2229 = vset.pattern.permute.xlu0 16
          %2230 = vperm.xlu0 %2229, %v1280
          %v2231 = vpop.permute.xlu0 %2230
          %2234 = vset.pattern.permute.xlu0 16
          %2235 = vperm.xlu0 %2234, %v1281
          %v2236 = vpop.permute.xlu0 %2235
          %2239 = vset.pattern.permute.xlu0 16
          %2240 = vperm.xlu0 %2239, %v1282
          %v2241 = vpop.permute.xlu0 %2240
          %2244 = vset.pattern.permute.xlu0 16
          %2245 = vperm.xlu0 %2244, %v1283
          %v2246 = vpop.permute.xlu0 %2245
          %2249 = vset.pattern.permute.xlu0 16
          %2250 = vperm.xlu0 %2249, %v1284
          %v2251 = vpop.permute.xlu0 %2250
          %v2253 = vmul.f32 %v2157, %v2176
          %v2254 = vmul.f32 %v2158, %v2181
          %v2255 = vmul.f32 %v2159, %v2186
          %v2256 = vmul.f32 %v2160, %v2191
          %v2257 = vmul.f32 %v2161, %v2196
          %v2258 = vmul.f32 %v2162, %v2201
          %v2259 = vmul.f32 %v2163, %v2206
          %v2260 = vmul.f32 %v2164, %v2211
          %v2261 = vmul.f32 %v2165, %v2216
          %v2262 = vmul.f32 %v2166, %v2221
          %v2263 = vmul.f32 %v2167, %v2226
          %v2264 = vmul.f32 %v2168, %v2231
          %v2265 = vmul.f32 %v2169, %v2236
          %v2266 = vmul.f32 %v2170, %v2241
          %v2267 = vmul.f32 %v2171, %v2246
          %v2268 = vmul.f32 %v2172, %v2251
          %vm2269 = vcmp.eq.s32.totalorder %v2156, 2
          %v2270 = vsel %vm2269, %v2176, 0.0
          %v2271 = vsel %vm2269, %v2181, 0.0
          %v2272 = vsel %vm2269, %v2186, 0.0
          %v2273 = vsel %vm2269, %v2191, 0.0
          %v2274 = vsel %vm2269, %v2196, 0.0
          %v2275 = vsel %vm2269, %v2201, 0.0
          %v2276 = vsel %vm2269, %v2206, 0.0
          %v2277 = vsel %vm2269, %v2211, 0.0
          %v2278 = vsel %vm2269, %v2216, 0.0
          %v2279 = vsel %vm2269, %v2221, 0.0
          %v2280 = vsel %vm2269, %v2226, 0.0
          %v2281 = vsel %vm2269, %v2231, 0.0
          %v2282 = vsel %vm2269, %v2236, 0.0
          %v2283 = vsel %vm2269, %v2241, 0.0
          %v2284 = vsel %vm2269, %v2246, 0.0
          %v2285 = vsel %vm2269, %v2251, 0.0
          %v2286 = vadd.f32 %v2253, %v2270
          %v2287 = vadd.f32 %v2254, %v2271
          %v2288 = vadd.f32 %v2255, %v2272
          %v2289 = vadd.f32 %v2256, %v2273
          %v2290 = vadd.f32 %v2257, %v2274
          %v2291 = vadd.f32 %v2258, %v2275
          %v2292 = vadd.f32 %v2259, %v2276
          %v2293 = vadd.f32 %v2260, %v2277
          %v2294 = vadd.f32 %v2261, %v2278
          %v2295 = vadd.f32 %v2262, %v2279
          %v2296 = vadd.f32 %v2263, %v2280
          %v2297 = vadd.f32 %v2264, %v2281
          %v2298 = vadd.f32 %v2265, %v2282
          %v2299 = vadd.f32 %v2266, %v2283
          %v2300 = vadd.f32 %v2267, %v2284
          %v2301 = vadd.f32 %v2268, %v2285
          %2302 = vst [vmem:[%s393] sm:$0xff] %v2286
          %2303 = vst [vmem:[%s393 + $0x8] sm:$0xff] %v2287
          %2304 = vst [vmem:[%s393 + $0x10] sm:$0xff] %v2288
          %2305 = vst [vmem:[%s393 + $0x18] sm:$0xff] %v2289
          %2306 = vst [vmem:[%s393 + $0x20] sm:$0xff] %v2290
          %2307 = vst [vmem:[%s393 + $0x28] sm:$0xff] %v2291
          %2308 = vst [vmem:[%s393 + $0x30] sm:$0xff] %v2292
          %2309 = vst [vmem:[%s393 + $0x38] sm:$0xff] %v2293
          %2310 = vst [vmem:[%s393 + $0x40] sm:$0xff] %v2294
          %2311 = vst [vmem:[%s393 + $0x48] sm:$0xff] %v2295
          %2312 = vst [vmem:[%s393 + $0x50] sm:$0xff] %v2296
          %2313 = vst [vmem:[%s393 + $0x58] sm:$0xff] %v2297
          %2314 = vst [vmem:[%s393 + $0x60] sm:$0xff] %v2298
          %2315 = vst [vmem:[%s393 + $0x68] sm:$0xff] %v2299
          %2316 = vst [vmem:[%s393 + $0x70] sm:$0xff] %v2300
          %2317 = vst [vmem:[%s393 + $0x78] sm:$0xff] %v2301
        $region76: #{tpu_custom_call.1} parent=43 // pred_fallthru
          _
        %s2318 = sand.u32 %s183, 1
        %s2319 = scalar_lea.sflag [#allocation4], %s2318
        %s2320 = sand.u32 %s183, 1
        %s2321 = smul.addr %s2320, 128
        %s2322 = scalar_lea.vmem [#allocation12], %s2321
        // Predicated region
        $region77: #{tpu_custom_call.1} parent=43 // pred_check
          %p2323 = pneg %p193
        $region78: #{tpu_custom_call.1} parent=43 // pred_check_branch
          %2325 = sbr.rel (%p2323) target = $region80
        $region79: #{tpu_custom_call.1} parent=43 // pred_region
          %s2326 = smul.u32 16, %s29
          %2328 = vsyncadd %s2319, 0
          %s2329 = smul.addr %s2326, 8
          %s2330 = scalar_lea.hbm %s6, %s2329
          %s2331 = sshll.u32 %s2322, 4
          %s2332 = int_to_ptr.vmem [resolvable:$true] %s2331
          %s2333 = sshll.u32 %s2330, 4
          %s2334 = int_to_ptr.hbm [resolvable:$true] %s2333
          %2339 = dma.vmem_to_hbm [thread:$0]  %s2332, 2048, %s2334, %s2319, 128, 128, 8
        $region80: #{tpu_custom_call.1} parent=43 // pred_fallthru
          _
      $region44: #{tpu_custom_call.1} parent=5 // pred_fallthru
        _
      %p2340 = scmp.le.s32.totalorder 2, %s20
      // Predicated region
      $region81: #{tpu_custom_call.1} parent=5 // pred_check
        %p2341 = pneg %p2340
      $region82: #{tpu_custom_call.1} parent=5 // pred_check_branch
        %2343 = sbr.rel (%p2341) target = $region84
      $region83: #{tpu_custom_call.1} parent=5 // pred_region
        %s2344 = ssub.s32 %s20, 2
        // Predicated region
        $region85: #{tpu_custom_call.1} parent=83 // pred_check
          %p2345 = pneg %p199
        $region86: #{tpu_custom_call.1} parent=83 // pred_check_branch
          %2347 = sbr.rel (%p2345) target = $region88
        $region87: #{tpu_custom_call.1} parent=83 // pred_region
          %s2348 = sand.u32 %s184, 1
          %s2349 = scalar_lea.sflag [#allocation4], %s2348
          %s2350 = sand.u32 %s184, 1
          %s2351 = smul.addr %s2350, 128
          %s2352 = scalar_lea.vmem [#allocation12], %s2351
          %2354 = dma.done %s2349, 2048
        $region88: #{tpu_custom_call.1} parent=83 // pred_fallthru
          _
      $region84: #{tpu_custom_call.1} parent=5 // pred_fallthru
        _
    $region6: #{tpu_custom_call.1} parent=1 // loop_footer
      %s24 = sadd.s32 1, %s20
    $region7: #{tpu_custom_call.1} parent=1 // loop_footer_branch
      %19 = sbr.rel target = $region3
    $region8: #{tpu_custom_call.1} parent=1 // loop_exit
      _
    %2355 = vsyncpa [#allocation3], 1
    %s2356 = scalar_lea.sflag [#allocation3], 1
    %2357 = vsyncpa %s2356, 1
    %2358 = vsyncpa [#allocation6], 1
    %2359 = vsyncpa [#allocation9], 1
    %2360 = vsyncpa [#allocation4], 1
    %s2361 = scalar_lea.sflag [#allocation4], 1
    %2362 = vsyncpa %s2361, 1

</llo_original>
